<compile_context>
chip_gen: v7x
topology: tpu7x:2x2x1
jax: 0.10.0
libtpu: 0.0.40
codegen_flags: <defaults>
</compile_context>

<pallas_src>
import functools

import numpy as np
import jax
import jax.numpy as jnp
from jax.experimental import pallas as pl
from jax.experimental.pallas import tpu as pltpu


YOLO_ARCHITECTURE = [
    (7, 64, 2, 3), 'maxpool',
    (3, 192, 1, 1), 'maxpool',
    (1, 128, 1, 0), (3, 256, 1, 1), (1, 256, 1, 0), (3, 512, 1, 1), 'maxpool',
    [(1, 256, 1, 0), (3, 512, 1, 1), 4],
    (1, 512, 1, 0), (3, 1024, 1, 1), 'maxpool',
    [(1, 512, 1, 0), (3, 1024, 1, 1), 2],
    (3, 1024, 1, 1), (3, 1024, 2, 1), (3, 1024, 1, 1), (3, 1024, 1, 1),
]

BN_EPS = 1e-5

# Tile caps (identical on all generations: MXU width does not constrain the
# Pallas block shape -- Mosaic decomposes any tile into MXU passes).
_TM_CAP = 512
_TN_CAP = 512
_TK_CAP = 2048


def _roundup(x, m):
    return ((x + m - 1) // m) * m


def _largest_div(total, cap, step):
    """Largest multiple of `step` that divides `total` and is <= cap (or None)."""
    best = None
    for cand in range(step, min(cap, total) + 1, step):
        if total % cand == 0:
            best = cand
    return best


def _device_kind():
    try:
        return jax.devices()[0].device_kind.lower().replace(' ', '')
    except Exception:
        return ""


def _is_v7x():
    kind = _device_kind()
    return ('v7' in kind) or ('tpu7' in kind)


def _vmem_capacity_bytes():
    try:
        cap = int(pltpu.get_tpu_info().vmem_capacity_bytes)
        if cap > 0:
            return cap
    except Exception:
        pass
    # Fallback: v7x has 64 MiB/TC, v5e/v6e have 128 MiB.
    return (64 << 20) if _is_v7x() else (128 << 20)


_VMEM_CAP = _vmem_capacity_bytes()
_VMEM_LIMIT = min((_VMEM_CAP * 3) // 4, 96 << 20)   # explicit scoped limit
_TILE_BUDGET = _VMEM_LIMIT - (6 << 20)              # headroom for misc scratch
_IS_V7X = _is_v7x()


# --------------------------- tile / layout choice --------------------------- #
def _choose_tm(M):
    """Pick (tm, Mp).  Prefer a divisor of M (no row padding)."""
    if M <= _TM_CAP:
        Mp = _roundup(M, 8)
        return Mp, Mp
    tm = _largest_div(M, _TM_CAP, 8)
    if tm is not None and tm >= 64:
        return tm, M
    return _TM_CAP, _roundup(M, _TM_CAP)   # rare fallback: pad rows


def _choose_k(K):
    Kp = _roundup(K, 128)
    tk = _largest_div(Kp, _TK_CAP, 128)
    return Kp, tk


def _choose_n(N):
    Np = _roundup(N, 128)
    tn = _largest_div(Np, _TN_CAP, 128)
    return Np, tn


def _dim_semantics(grid0):
    """Outermost axis goes CORE_PARALLEL on v7x (2 TensorCores) when even."""
    if _IS_V7X and grid0 >= 2 and grid0 % 2 == 0:
        cp = getattr(pltpu, "CORE_PARALLEL", None)
        if cp is not None:
            par = getattr(pltpu, "PARALLEL", "parallel")
            arb = getattr(pltpu, "ARBITRARY", "arbitrary")
            return (cp, par, arb)
    return ("parallel", "parallel", "arbitrary")


# ------------------------------ Pallas kernel ------------------------------ #
def _fused_kernel(x_ref, w_ref, b_ref, o_ref, acc_ref, *,
                  tk, n_k, resident, trim, apply_act, neg_slope):
    """One (TM, TN) output tile: acc += x_tile @ w_tile (bf16 in, f32 acc);
    finalize with per-column shift (BN/bias, scale pre-folded into weights)
    and optional LeakyReLU.  `resident`: weight ref is the full-K strip and is
    sliced per K step with pl.ds."""
    k = pl.program_id(2)

    @pl.when(k == 0)
    def _():
        acc_ref[...] = jnp.zeros_like(acc_ref)

    if resident and n_k > 1:
        off = pl.multiple_of(k * tk, tk)
        w_tile = w_ref[pl.ds(off, tk), :]
    else:
        w_tile = w_ref[...]
    acc_ref[...] += jnp.dot(x_ref[...], w_tile,
                            preferred_element_type=jnp.float32)

    @pl.when(k == n_k - 1)
    def _():
        y = acc_ref[...] + b_ref[...]
        if apply_act:                     # trace-time branch: FC2 skips it
            y = jnp.where(y >= 0, y, neg_slope * y)
        if trim is not None:              # write only the valid N columns
            y = y[:, :trim]
        o_ref[...] = y.astype(o_ref.dtype)


def fused_matmul(x, layer, *, apply_act, neg_slope=0.1, out_dtype=jnp.bfloat16):
    """(M, Kp) bf16 activations @ pre-padded bf16 weight (Kp, Np), + shift,
    + optional LeakyReLU.  Returns (M, N) in out_dtype."""
    x = x.astype(jnp.bfloat16)
    M, Kx = x.shape
    wp, bp = layer['w'], layer['shift']
    Kp, Np = wp.shape
    N, tk, tn = layer['n'], layer['tk'], layer['tn']
    assert Kx == Kp, (Kx, Kp)

    tm, Mp = _choose_tm(M)
    xp = x if Mp == M else jnp.pad(x, ((0, Mp - M), (0, 0)))

    gm, gk = Mp // tm, Kp // tk
    gn = Np // tn
    out_item = np.dtype(out_dtype).itemsize

    def vmem_need(tn_, resident_):
        w_rows = Kp if resident_ else tk
        return (2 * tm * tk * 2            # x blocks (bf16, double-buffered)
                + 2 * w_rows * tn_ * 2     # w blocks
                + 2 * tn_ * 4              # shift blocks
                + 2 * tm * tn_ * out_item  # out blocks
                + tm * tn_ * 4)            # f32 accumulator scratch

    # Weight-resident mode: weight DMA'd once per column strip instead of once
    # per M tile.  Pick the widest column strip that fits the VMEM budget
    # (full Np on 128 MiB parts, narrower on v7x's 64 MiB).
    resident = False
    if gm > 1:
        for tn_r in [Np] + [t for t in (512, 256, 128) if t < Np and Np % t == 0]:
            if vmem_need(tn_r, True) <= _TILE_BUDGET:
                resident, tn, gn = True, tn_r, Np // tn_r
                break

    trim = N if (Np > N and gn == 1) else None   # masked stores, no slice copy
    o_cols = N if trim is not None else Np
    o_tn = N if trim is not None else tn

    if resident:
        grid = (gn, gm, gk)                      # n outermost -> weight fetched once per strip
        x_spec = pl.BlockSpec((tm, tk), lambda j, i, k: (i, k))
        w_spec = pl.BlockSpec((Kp, tn), lambda j, i, k: (0, j))
        b_spec = pl.BlockSpec((1, tn), lambda j, i, k: (0, j))
        o_spec = pl.BlockSpec((tm, o_tn), lambda j, i, k: (i, j))
    else:
        grid = (gm, gn, gk)
        x_spec = pl.BlockSpec((tm, tk), lambda i, j, k: (i, k))
        w_spec = pl.BlockSpec((tk, tn), lambda i, j, k: (k, j))
        b_spec = pl.BlockSpec((1, tn), lambda i, j, k: (0, j))
        o_spec = pl.BlockSpec((tm, o_tn), lambda i, j, k: (i, j))

    # Account for operand re-streaming in the advisory cost estimate.
    x_reads = gn if (resident or gk > 1) else 1
    w_reads = 1 if resident else (gm if (gn > 1 or gk > 1) else 1)
    cost = pl.CostEstimate(
        flops=2 * Mp * Kp * Np,
        transcendentals=0,
        bytes_accessed=int(x_reads * Mp * Kp * 2 + w_reads * Kp * Np * 2
                           + Mp * o_cols * out_item),
    )

    out = pl.pallas_call(
        functools.partial(_fused_kernel, tk=tk, n_k=gk, resident=resident,
                          trim=trim, apply_act=apply_act, neg_slope=neg_slope),
        out_shape=jax.ShapeDtypeStruct((Mp, o_cols), out_dtype),
        grid_spec=pltpu.PrefetchScalarGridSpec(
            num_scalar_prefetch=0,
            grid=grid,
            in_specs=[x_spec, w_spec, b_spec],
            out_specs=o_spec,
            scratch_shapes=[pltpu.VMEM((tm, tn), jnp.float32)],
        ),
        compiler_params=pltpu.CompilerParams(
            dimension_semantics=_dim_semantics(grid[0]),
            vmem_limit_bytes=_VMEM_LIMIT),
        cost_estimate=cost,
    )(xp, wp, bp)

    if Mp != M:
        out = out[:M]
    if o_cols != N:
        out = out[:, :N]
    return out


# ------------------------------- glue (JAX) -------------------------------- #
def im2col(x, kh, kw, stride, pad, k_pad):
    """x: (N, H, W, C) NHWC bf16 -> patches (N*OH*OW, kh*kw*C + k_pad), OH, OW.
    K padding is appended inside the single concat write (no extra pad pass).
    1x1 stride-1 convs with aligned channels are a pure reshape (no copy)."""
    if pad > 0:
        x = jnp.pad(x, ((0, 0), (pad, pad), (pad, pad), (0, 0)))
    n, h, w, c = x.shape
    oh = (h - kh) // stride + 1
    ow = (w - kw) // stride + 1
    if kh == 1 and kw == 1 and stride == 1 and k_pad == 0:
        return x.reshape(n * oh * ow, c), oh, ow
    cols = []
    for i in range(kh):
        for j in range(kw):
            cols.append(x[:, i:i + stride * oh:stride, j:j + stride * ow:stride, :])
    if k_pad > 0:
        cols.append(jnp.zeros((n, oh, ow, k_pad), x.dtype))
    patches = jnp.concatenate(cols, axis=-1)
    return patches.reshape(n * oh * ow, kh * kw * c + k_pad), oh, ow


def maxpool2x2(x):
    n, h, w, c = x.shape
    return x.reshape(n, h // 2, 2, w // 2, 2, c).max(axis=(2, 4))


# ---------------------------- parameter setup ------------------------------ #
def _make_fused_layer(w_kn, scale, shift, K, N):
    """Fold the per-column scale into the weight, pad + cast to bf16 once."""
    Kp, tk = _choose_k(K)
    Np, tn = _choose_n(N)
    w_scaled = (w_kn.astype(jnp.float32)
                * scale[None, :].astype(jnp.float32)).astype(jnp.bfloat16)
    if (Kp, Np) == (K, N):
        wp = w_scaled
    else:
        wp = jnp.zeros((Kp, Np), jnp.bfloat16).at[:K, :N].set(w_scaled)
    bp = jnp.zeros((1, Np), jnp.float32).at[0, :N].set(shift.astype(jnp.float32))
    return {'w': wp, 'shift': bp, 'n': N, 'tk': tk, 'tn': tn, 'k_pad': Kp - K}


def init_params(key, in_channels, split_size, num_boxes, num_classes):
    keys = iter(jax.random.split(key, 256))
    darknet = []
    cin = in_channels

    def make_conv_bn(cin, cout, k, s, p):
        kw_key, g_key, b_key, m_key, v_key = (next(keys) for _ in range(5))
        fan_in = cin * k * k
        # stored as (kh*kw*cin, cout) matching the im2col tap ordering
        w = (jax.random.normal(kw_key, (k, k, cin, cout), jnp.float32)
             * (1.0 / jnp.sqrt(fan_in))).reshape(k * k * cin, cout)
        gamma = 0.5 + jax.random.uniform(g_key, (cout,), jnp.float32)
        beta = 0.1 * jax.random.normal(b_key, (cout,), jnp.float32)
        r_mean = 0.1 * jax.random.normal(m_key, (cout,), jnp.float32)
        r_var = 0.5 + jax.random.uniform(v_key, (cout,), jnp.float32)
        scale = gamma / jnp.sqrt(r_var + BN_EPS)
        shift = beta - r_mean * scale
        layer = _make_fused_layer(w, scale, shift, k * k * cin, cout)
        layer.update({'type': 'conv', 'k': k, 's': s, 'p': p})
        return layer

    for entry in YOLO_ARCHITECTURE:
        if isinstance(entry, tuple):
            k, cout, s, p = entry
            darknet.append(make_conv_bn(cin, cout, k, s, p))
            cin = cout
        elif isinstance(entry, str):
            darknet.append({'type': 'maxpool'})
        elif isinstance(entry, list):
            c1, c2, rep = entry
            for _ in range(rep):
                darknet.append(make_conv_bn(cin, c1[1], c1[0], c1[2], c1[3]))
                darknet.append(make_conv_bn(c1[1], c2[1], c2[0], c2[2], c2[3]))
                cin = c2[1]

    S, B, C = split_size, num_boxes, num_classes
    fc_in = 1024 * S * S
    fc_hidden = 4096
    fc_out = S * S * (C + B * 5)
    k1, k2, k3, k4 = (next(keys) for _ in range(4))
    fc1_w = jax.random.normal(k1, (fc_in, fc_hidden), jnp.float32) / jnp.sqrt(fc_in)
    fc1_b = 0.1 * jax.random.normal(k2, (fc_hidden,), jnp.float32)
    fc2_w = jax.random.normal(k3, (fc_hidden, fc_out), jnp.float32) / jnp.sqrt(fc_hidden)
    fc2_b = 0.1 * jax.random.normal(k4, (fc_out,), jnp.float32)

    # fc1 rows are defined in PyTorch's (C, H, W) flatten order; permute them
    # once so the forward pass can flatten the NHWC activation directly.
    perm = np.transpose(np.arange(fc_in).reshape(1024, S, S), (1, 2, 0)).reshape(-1)
    fc1_w = fc1_w[perm]

    fc1 = _make_fused_layer(fc1_w, jnp.ones((fc_hidden,), jnp.float32), fc1_b,
                            fc_in, fc_hidden)
    fc2 = _make_fused_layer(fc2_w, jnp.ones((fc_out,), jnp.float32), fc2_b,
                            fc_hidden, fc_out)

    return {'darknet': darknet, 'fc1': fc1, 'fc2': fc2}


# ------------------------------ forward pass ------------------------------- #
def yolov1_forward(x_nchw, params):
    # NCHW (PyTorch) -> NHWC (internal compute layout), bf16 activations.
    x = jnp.transpose(x_nchw, (0, 2, 3, 1)).astype(jnp.bfloat16)

    for layer in params['darknet']:
        if layer['type'] == 'maxpool':
            x = maxpool2x2(x)
        else:
            k, s, p = layer['k'], layer['s'], layer['p']
            cols, oh, ow = im2col(x, k, k, s, p, layer['k_pad'])
            y = fused_matmul(cols, layer, apply_act=True, neg_slope=0.1,
                             out_dtype=jnp.bfloat16)
            x = y.reshape(x.shape[0], oh, ow, -1)

    # NHWC flatten (fc1 rows were permuted at init, so no transpose needed).
    n = x.shape[0]
    flat = x.reshape(n, -1)
    if params['fc1']['k_pad'] > 0:
        flat = jnp.pad(flat, ((0, 0), (0, params['fc1']['k_pad'])))

    h = fused_matmul(flat, params['fc1'], apply_act=True, neg_slope=0.1,
                     out_dtype=jnp.bfloat16)
    # Dropout(0.5) -> identity (eval mode)
    out = fused_matmul(h, params['fc2'], apply_act=False,
                       out_dtype=jnp.float32)   # no activation on FC2
    return out


# ---------------------------------- main ----------------------------------- #
if __name__ == "__main__":
    key = jax.random.PRNGKey(0)
    p_key, x_key = jax.random.split(key)

    # Small shapes: 64x64 input -> 1x1 darknet output (S=1), B=2 boxes, C=3 classes
    BATCH, IN_CH, IMG = 2, 3, 64
    S, B, C = 1, 2, 3

    params = init_params(p_key, IN_CH, split_size=S, num_boxes=B, num_classes=C)
    x = jax.random.normal(x_key, (BATCH, IN_CH, IMG, IMG), jnp.float32)

    out = yolov1_forward(x, params)
    out = jax.block_until_ready(out)

    expected = (BATCH, S * S * (C + B * 5))
    assert out.shape == expected, (out.shape, expected)
    assert jnp.all(jnp.isfinite(out))
    print("KERNEL_OK")
</pallas_src>

<mosaic_0001>
module attributes {stable_mosaic.version = 11 : i64} {
  func.func @_fused_kernel(%arg0: i32, %arg1: i32, %arg2: i32, %arg3: memref<512x256xbf16, #tpu.memory_space<vmem>>, %arg4: memref<256x128xbf16, #tpu.memory_space<vmem>>, %arg5: memref<1x128xf32, #tpu.memory_space<vmem>>, %arg6: memref<512x64xbf16, #tpu.memory_space<vmem>>, %arg7: memref<512x128xf32, #tpu.memory_space<vmem>>) attributes {dimension_semantics = [#tpu.dimension_semantics<parallel>, #tpu.dimension_semantics<parallel>, #tpu.dimension_semantics<arbitrary>], iteration_bounds = array<i64: 1, 4, 1>, scalar_prefetch = 0 : i64, scratch_operands = 1 : i64, tpu.core_type = #tpu.core_type<tc>, window_params = [{transform_indices = @transform_0, window_bounds = array<i64: 512, 256>}, {transform_indices = @transform_1, window_bounds = array<i64: 256, 128>}, {transform_indices = @transform_2, window_bounds = array<i64: 1, 128>}, {transform_indices = @transform_3, window_bounds = array<i64: 512, 64>}]} {
    %c0_i32 = arith.constant 0 : i32
    %0 = arith.cmpi eq, %arg2, %c0_i32 : i32
    %1 = arith.extui %0 : i1 to i32
    %c0_i32_0 = arith.constant 0 : i32
    %2 = arith.cmpi ne, %1, %c0_i32_0 : i32
    scf.if %2 {
      %cst_10 = arith.constant 0.000000e+00 : f32
      %12 = vector.broadcast %cst_10 : f32 to vector<512x128xf32>
      %c0_11 = arith.constant 0 : index
      %c0_12 = arith.constant 0 : index
      %13 = vector.load %arg7[%c0_11, %c0_12] : memref<512x128xf32, #tpu.memory_space<vmem>>, vector<512x128xf32>
      tpu.vector_store %arg7[%c0_11, %c0_12], %12 {strides = array<i32>} : memref<512x128xf32, #tpu.memory_space<vmem>>, vector<512x128xf32>,
    } else {
    }
    %c0 = arith.constant 0 : index
    %c0_1 = arith.constant 0 : index
    %3 = vector.load %arg4[%c0, %c0_1] : memref<256x128xbf16, #tpu.memory_space<vmem>>, vector<256x128xbf16>
    %c0_2 = arith.constant 0 : index
    %c0_3 = arith.constant 0 : index
    %4 = vector.load %arg7[%c0_2, %c0_3] : memref<512x128xf32, #tpu.memory_space<vmem>>, vector<512x128xf32>
    %c0_4 = arith.constant 0 : index
    %c0_5 = arith.constant 0 : index
    %5 = vector.load %arg3[%c0_4, %c0_5] : memref<512x256xbf16, #tpu.memory_space<vmem>>, vector<512x256xbf16>
    %cst = arith.constant dense<0.000000e+00> : vector<512x128xf32>
    %6 = tpu.matmul %5, %3, %cst {dimension_numbers = #tpu.dot_dimension_numbers<[1], [0], [0], [1], [0, 0, 1, 1], [], []>} : vector<512x256xbf16>, vector<256x128xbf16>, vector<512x128xf32> -> vector<512x128xf32>
    %7 = arith.addf %4, %6 : vector<512x128xf32>
    %c0_6 = arith.constant 0 : index
    %c0_7 = arith.constant 0 : index
    %8 = vector.load %arg7[%c0_6, %c0_7] : memref<512x128xf32, #tpu.memory_space<vmem>>, vector<512x128xf32>
    tpu.vector_store %arg7[%c0_6, %c0_7], %7 {strides = array<i32>} : memref<512x128xf32, #tpu.memory_space<vmem>>, vector<512x128xf32>,
    %c0_i32_8 = arith.constant 0 : i32
    %9 = arith.cmpi eq, %arg2, %c0_i32_8 : i32
    %10 = arith.extui %9 : i1 to i32
    %c0_i32_9 = arith.constant 0 : i32
    %11 = arith.cmpi ne, %10, %c0_i32_9 : i32
    scf.if %11 {
      %c0_10 = arith.constant 0 : index
      %c0_11 = arith.constant 0 : index
      %12 = vector.load %arg7[%c0_10, %c0_11] : memref<512x128xf32, #tpu.memory_space<vmem>>, vector<512x128xf32>
      %c0_12 = arith.constant 0 : index
      %c0_13 = arith.constant 0 : index
      %13 = vector.load %arg5[%c0_12, %c0_13] : memref<1x128xf32, #tpu.memory_space<vmem>>, vector<1x128xf32>
      %14 = vector.broadcast %13 : vector<1x128xf32> to vector<512x128xf32>
      %15 = arith.addf %12, %14 : vector<512x128xf32>
      %cst_14 = arith.constant 0.000000e+00 : f32
      %16 = vector.broadcast %cst_14 : f32 to vector<512x128xf32>
      %17 = arith.cmpf oge, %15, %16 : vector<512x128xf32>
      %cst_15 = arith.constant 1.000000e-01 : f32
      %18 = vector.broadcast %cst_15 : f32 to vector<512x128xf32>
      %19 = arith.mulf %18, %15 : vector<512x128xf32>
      %20 = arith.select %17, %15, %19 : vector<512x128xi1>, vector<512x128xf32>
      %21 = vector.extract_strided_slice %20 {offsets = [0, 0], sizes = [512, 64], strides = [1, 1]} : vector<512x128xf32> to vector<512x64xf32>
      %22 = arith.truncf %21 : vector<512x64xf32> to vector<512x64xbf16>
      %c0_16 = arith.constant 0 : index
      %c0_17 = arith.constant 0 : index
      %23 = vector.load %arg6[%c0_16, %c0_17] : memref<512x64xbf16, #tpu.memory_space<vmem>>, vector<512x64xbf16>
      tpu.vector_store %arg6[%c0_16, %c0_17], %22 {strides = array<i32>} : memref<512x64xbf16, #tpu.memory_space<vmem>>, vector<512x64xbf16>,
    } else {
    }
    return
  }
  func.func @transform_0(%arg0: i32, %arg1: i32, %arg2: i32) -> (i32, i32) {
    %c0_i32 = arith.constant 0 : i32
    return %arg1, %arg2 : i32, i32
  }
  func.func @transform_1(%arg0: i32, %arg1: i32, %arg2: i32) -> (i32, i32) {
    %c0_i32 = arith.constant 0 : i32
    %c0_i32_0 = arith.constant 0 : i32
    return %c0_i32, %arg0 : i32, i32
  }
  func.func @transform_2(%arg0: i32, %arg1: i32, %arg2: i32) -> (i32, i32) {
    %c0_i32 = arith.constant 0 : i32
    %c0_i32_0 = arith.constant 0 : i32
    return %c0_i32, %arg0 : i32, i32
  }
  func.func @transform_3(%arg0: i32, %arg1: i32, %arg2: i32) -> (i32, i32) {
    %c0_i32 = arith.constant 0 : i32
    return %arg1, %arg0 : i32, i32
  }
}

</mosaic_0001>

<llo_original>
// kernel: tpu_custom_call.1
$region0: #{tpu_custom_call.1}
  #allocation0 [shape = 'u32[]', space=smem, size = 0x4, offset = 0x4, fixed_abs, tag = 'smem constant byte address 0x4 - core index']
  #allocation1 [shape = 'u32[144,128]{1,0:T(1,128)}', space=vmem, size = 0x12000, scoped, tag = 'internal scratch']
  #allocation2 [shape = 'f32[512,128]{1,0:T(8,128)}', space=vmem, size = 0x40000, scoped, tag = 'scratch operand']
  %s0 = inlined_call_operand.hbm [shape: bf16[2048,256], index: 0, kind: input, shape index: {}]
  %s1 = inlined_call_operand.hbm [shape: bf16[256,128], index: 1, kind: input, shape index: {}]
  %s2 = inlined_call_operand.hbm [shape: f32[1,128], index: 2, kind: input, shape index: {}]
  %s3 = inlined_call_operand.hbm [shape: bf16[2048,64], index: 3, kind: output, shape index: {}]
  %s4 = sld [smem:[#allocation0]]
  $region65: #{tpu_custom_call.1} parent=0
    _
  %s6 = ssub.s32 1, %s4
  %s7 = scalar_select 0, %s6, %s4
  $region1: #{tpu_custom_call.1} parent=0
    #allocation3 [shape = 'u8[524288]{0}', space=vmem, size = 0x80000, scoped, tag = 'input window, operand 0']
    #allocation4 [shape = 's32[2]{0}', space=sflag, size = 0x8, scoped, tag = 'scoped memory for tpu_custom_call.1']
    #allocation5 [shape = 's32[2]{0}', space=sflag, size = 0x8, scoped, tag = 'scoped memory for tpu_custom_call.1']
    #allocation6 [shape = 'u8[65536]{0}', space=vmem, size = 0x10000, scoped, tag = 'input window, operand 1, single buffered']
    #allocation7 [shape = 's32[1]{0}', space=sflag, size = 0x4, scoped, tag = 'scoped memory for tpu_custom_call.1']
    #allocation8 [shape = 'u8[512]{0}', space=vmem, size = 0x400, scoped, tag = 'input window, operand 2, single buffered']
    #allocation9 [shape = 'u8[262144]{0}', space=vmem, size = 0x40000, scoped, tag = 'output window, operand 0']
    %8 = vsyncpa [#allocation4], 0
    %s9 = scalar_lea.sflag [#allocation4], 1
    %10 = vsyncpa %s9, 0
    %11 = vsyncpa [#allocation7], 0
    %12 = vsyncpa [#allocation5], 0
    %s13 = scalar_lea.sflag [#allocation5], 1
    %14 = vsyncpa %s13, 0
    loop: start=0, step=1, limit=6
    $region2: #{tpu_custom_call.1} parent=1 // loop_pre_header
      _
    $region3: #{tpu_custom_call.1} parent=1 // loop_header
      %s16 = sphi 0, %s20
      %p17 = scmp.ge.s32.totalorder %s16, 6
      %s23 = sphi 0, %s42
      %s24 = sphi 0, %s38
      %s25 = sphi 0, %s34
      %s26 = sphi 0, %s23
      %s27 = sphi 0, %s24
      %s28 = sphi 0, %s25
      %s29 = sphi 0, %s26
      %s30 = sphi 0, %s27
      %s31 = sphi 0, %s28
      %s47 = sphi 0, %s49
      %s50 = sphi 0, %s47
      %s51 = sphi 0, %s50
      %s67 = sphi 0, %s51
      %s73 = sphi 0, %s75
      %s76 = sphi 0, %s73
      %s77 = sphi 0, %s76
      %s93 = sphi 0, %s77
      %s99 = sphi 0, %s101
      %s102 = sphi 0, %s99
      %s103 = sphi 0, %s102
      %s119 = sphi 0, %s103
      %s127 = sphi 0, %s129
      %s130 = sphi 0, %s127
      %s131 = sphi 0, %s130
      %s147 = sphi 0, %s131
    $region4: #{tpu_custom_call.1} parent=1 // loop_header_branch
      %19 = sbr.rel (%p17) target = $region8
    $region5: #{tpu_custom_call.1} parent=1 // loop_body
      %s21 = ssub.s32 %s16, 1
      %s22 = ssub.s32 %s16, 2
      %s32 = sadd.s32 1, %s25
      %p33 = scmp.ge.s32.totalorder %s32, 1
      %s34 = scalar_select %p33, 0, %s32
      %s35 = sadd.s32 1, %s24
      %s36 = scalar_select %p33, %s35, %s24
      %p37 = scmp.ge.s32.totalorder %s36, 4
      %s38 = scalar_select %p37, 0, %s36
      %s39 = sadd.s32 1, %s23
      %s40 = scalar_select %p37, %s39, %s23
      %p41 = scmp.ge.s32.totalorder %s40, 1
      %s42 = scalar_select %p41, 0, %s40
      %s43 = ssub.s32 %s24, %s38
      %s44 = ssub.s32 %s25, %s34
      %s45 = sor.u32 %s43, %s44
      %p46 = scmp.eq.s32.totalorder %s45, 0
      %s48 = sadd.s32 %s47, 1
      %s49 = scalar_select %p46, %s47, %s48
      %p52 = pneg %p46
      %p53 = scmp.eq.s32.totalorder %s16, 3
      %p54 = por %p52, %p53
      %p55 = scmp.ne.s32.totalorder %s47, %s50
      %p56 = scmp.eq.s32.totalorder %s16, 0
      %p57 = por %p55, %p56
      %p58 = scmp.ne.s32.totalorder %s47, %s50
      %p59 = scmp.eq.s32.totalorder %s21, 3
      %p60 = por %p58, %p59
      %p61 = scmp.ne.s32.totalorder %s50, %s51
      %p62 = scmp.eq.s32.totalorder %s21, 0
      %p63 = por %p61, %p62
      %p64 = scmp.ne.s32.totalorder %s50, %s51
      %p65 = scmp.eq.s32.totalorder %s22, 3
      %p66 = por %p64, %p65
      %p68 = scmp.ne.s32.totalorder %s51, %s67
      %p69 = scmp.eq.s32.totalorder %s22, 0
      %p70 = por %p68, %p69
      %s71 = ssub.s32 %s23, %s42
      %p72 = scmp.eq.s32.totalorder %s71, 0
      %s74 = sadd.s32 %s73, 1
      %s75 = scalar_select %p72, %s73, %s74
      %p78 = pneg %p72
      %p79 = scmp.eq.s32.totalorder %s16, 3
      %p80 = por %p78, %p79
      %p81 = scmp.ne.s32.totalorder %s73, %s76
      %p82 = scmp.eq.s32.totalorder %s16, 0
      %p83 = por %p81, %p82
      %p84 = scmp.ne.s32.totalorder %s73, %s76
      %p85 = scmp.eq.s32.totalorder %s21, 3
      %p86 = por %p84, %p85
      %p87 = scmp.ne.s32.totalorder %s76, %s77
      %p88 = scmp.eq.s32.totalorder %s21, 0
      %p89 = por %p87, %p88
      %p90 = scmp.ne.s32.totalorder %s76, %s77
      %p91 = scmp.eq.s32.totalorder %s22, 3
      %p92 = por %p90, %p91
      %p94 = scmp.ne.s32.totalorder %s77, %s93
      %p95 = scmp.eq.s32.totalorder %s22, 0
      %p96 = por %p94, %p95
      %s97 = ssub.s32 %s23, %s42
      %p98 = scmp.eq.s32.totalorder %s97, 0
      %s100 = sadd.s32 %s99, 1
      %s101 = scalar_select %p98, %s99, %s100
      %p104 = pneg %p98
      %p105 = scmp.eq.s32.totalorder %s16, 3
      %p106 = por %p104, %p105
      %p107 = scmp.ne.s32.totalorder %s99, %s102
      %p108 = scmp.eq.s32.totalorder %s16, 0
      %p109 = por %p107, %p108
      %p110 = scmp.ne.s32.totalorder %s99, %s102
      %p111 = scmp.eq.s32.totalorder %s21, 3
      %p112 = por %p110, %p111
      %p113 = scmp.ne.s32.totalorder %s102, %s103
      %p114 = scmp.eq.s32.totalorder %s21, 0
      %p115 = por %p113, %p114
      %p116 = scmp.ne.s32.totalorder %s102, %s103
      %p117 = scmp.eq.s32.totalorder %s22, 3
      %p118 = por %p116, %p117
      %p120 = scmp.ne.s32.totalorder %s103, %s119
      %p121 = scmp.eq.s32.totalorder %s22, 0
      %p122 = por %p120, %p121
      %s123 = ssub.s32 %s24, %s38
      %s124 = ssub.s32 %s23, %s42
      %s125 = sor.u32 %s123, %s124
      %p126 = scmp.eq.s32.totalorder %s125, 0
      %s128 = sadd.s32 %s127, 1
      %s129 = scalar_select %p126, %s127, %s128
      %p132 = pneg %p126
      %p133 = scmp.eq.s32.totalorder %s16, 3
      %p134 = por %p132, %p133
      %p135 = scmp.ne.s32.totalorder %s127, %s130
      %p136 = scmp.eq.s32.totalorder %s16, 0
      %p137 = por %p135, %p136
      %p138 = scmp.ne.s32.totalorder %s127, %s130
      %p139 = scmp.eq.s32.totalorder %s21, 3
      %p140 = por %p138, %p139
      %p141 = scmp.ne.s32.totalorder %s130, %s131
      %p142 = scmp.eq.s32.totalorder %s21, 0
      %p143 = por %p141, %p142
      %p144 = scmp.ne.s32.totalorder %s130, %s131
      %p145 = scmp.eq.s32.totalorder %s22, 3
      %p146 = por %p144, %p145
      %p148 = scmp.ne.s32.totalorder %s131, %s147
      %p149 = scmp.eq.s32.totalorder %s22, 0
      %p150 = por %p148, %p149
      %p151 = scmp.le.s32.totalorder 1, %s16
      %p152 = scmp.lt.s32.totalorder %s16, 5
      %p153 = pnand %p151, %p152
      %p154 = pneg %p153
      // Predicated region
      $region9: #{tpu_custom_call.1} parent=5 // pred_check
        _
      $region10: #{tpu_custom_call.1} parent=5 // pred_check_branch
        %156 = sbr.rel (%p153) target = $region12
      $region11: #{tpu_custom_call.1} parent=5 // pred_region
        %s157 = ssub.s32 %s16, 1
        // Predicated region
        $region13: #{tpu_custom_call.1} parent=11 // pred_check
          %p158 = pneg %p89
        $region14: #{tpu_custom_call.1} parent=11 // pred_check_branch
          %160 = sbr.rel (%p158) target = $region16
        $region15: #{tpu_custom_call.1} parent=11 // pred_region
          %s162 = ssub.s32 2048, 2048
          %163 = vsyncadd [#allocation7], %s162
          %s164 = smul.addr %s26, 64
          %s165 = scalar_lea.hbm %s1, %s164
          %s166 = sshll.u32 [#allocation6], 4
          %s167 = int_to_ptr.vmem [resolvable:$true] %s166
          %172 = dma.hbm_to_vmem [thread:$0]  %s165, 2048, %s167, [#allocation7], 64, 64, 4
        $region16: #{tpu_custom_call.1} parent=11 // pred_fallthru
          _
        // Predicated region
        $region17: #{tpu_custom_call.1} parent=11 // pred_check
          %p173 = pneg %p115
        $region18: #{tpu_custom_call.1} parent=11 // pred_check_branch
          %175 = sbr.rel (%p173) target = $region20
        $region19: #{tpu_custom_call.1} parent=11 // pred_region
          %s177 = ssub.s32 16, 16
          %178 = vsyncadd [#allocation7], %s177
          %s179 = smul.addr %s26, 16
          %s180 = scalar_lea.hbm %s2, %s179
          %s182 = sshll.u32 [#allocation8], 4
          %s183 = int_to_ptr.vmem [resolvable:$true] %s182
          %185 = dma.hbm_to_vmem [thread:$0]  %s180, 16, %s183, [#allocation7]
        $region20: #{tpu_custom_call.1} parent=11 // pred_fallthru
          _
      $region12: #{tpu_custom_call.1} parent=5 // pred_fallthru
        _
      %p186 = scmp.lt.s32.totalorder %s16, 4
      // Predicated region
      $region21: #{tpu_custom_call.1} parent=5 // pred_check
        %p187 = pneg %p186
      $region22: #{tpu_custom_call.1} parent=5 // pred_check_branch
        %189 = sbr.rel (%p187) target = $region24
      $region23: #{tpu_custom_call.1} parent=5 // pred_region
        // Predicated region
        $region25: #{tpu_custom_call.1} parent=23 // pred_check
          %p190 = pneg %p57
        $region26: #{tpu_custom_call.1} parent=23 // pred_check_branch
          %192 = sbr.rel (%p190) target = $region28
        $region27: #{tpu_custom_call.1} parent=23 // pred_region
          %s193 = sand.u32 %s47, 1
          %s194 = scalar_lea.sflag [#allocation4], %s193
          %s195 = sand.u32 %s47, 1
          %s196 = smul.addr %s195, 512
          %s197 = scalar_lea.vmem [#allocation3], %s196
          %s198 = smul.u32 64, %s24
          %s199 = smul.u32 2, %s25
          %s201 = ssub.s32 8192, 8192
          %202 = vsyncadd %s194, %s201
          %s203 = smul.addr %s198, 2
          %s204 = sadd.s32 %s199, %s203
          %s205 = smul.addr %s204, 64
          %s206 = scalar_lea.hbm %s0, %s205
          %s207 = sshll.u32 %s197, 4
          %s208 = int_to_ptr.vmem [resolvable:$true] %s207
          %213 = dma.hbm_to_vmem [thread:$0]  %s206, 8192, %s208, %s194, 128, 128, 8
        $region28: #{tpu_custom_call.1} parent=23 // pred_fallthru
          _
      $region24: #{tpu_custom_call.1} parent=5 // pred_fallthru
        _
      %p214 = scmp.le.s32.totalorder 1, %s16
      %p215 = scmp.lt.s32.totalorder %s16, 5
      %p216 = pnand %p214, %p215
      %p217 = pneg %p216
      // Predicated region
      $region29: #{tpu_custom_call.1} parent=5 // pred_check
        _
      $region30: #{tpu_custom_call.1} parent=5 // pred_check_branch
        %219 = sbr.rel (%p216) target = $region32
      $region31: #{tpu_custom_call.1} parent=5 // pred_region
        %s220 = ssub.s32 %s16, 1
        %s221 = sand.u32 %s50, 1
        %s222 = scalar_lea.sflag [#allocation4], %s221
        %s223 = sand.u32 %s50, 1
        %s224 = smul.addr %s223, 512
        %s225 = scalar_lea.vmem [#allocation3], %s224
        // Predicated region
        $region33: #{tpu_custom_call.1} parent=31 // pred_check
          %p226 = pneg %p63
        $region34: #{tpu_custom_call.1} parent=31 // pred_check_branch
          %228 = sbr.rel (%p226) target = $region36
        $region35: #{tpu_custom_call.1} parent=31 // pred_region
          %229 = dma.done %s222, 8192
        $region36: #{tpu_custom_call.1} parent=31 // pred_fallthru
          _
        // Predicated region
        $region37: #{tpu_custom_call.1} parent=31 // pred_check
          %p230 = pneg %p89
        $region38: #{tpu_custom_call.1} parent=31 // pred_check_branch
          %232 = sbr.rel (%p230) target = $region40
        $region39: #{tpu_custom_call.1} parent=31 // pred_region
          %233 = dma.done [#allocation7], 2048
        $region40: #{tpu_custom_call.1} parent=31 // pred_fallthru
          _
        // Predicated region
        $region41: #{tpu_custom_call.1} parent=31 // pred_check
          %p234 = pneg %p115
        $region42: #{tpu_custom_call.1} parent=31 // pred_check_branch
          %236 = sbr.rel (%p234) target = $region44
        $region43: #{tpu_custom_call.1} parent=31 // pred_region
          %237 = dma.done [#allocation7], 16
        $region44: #{tpu_custom_call.1} parent=31 // pred_fallthru
          _
        %s238 = sand.u32 %s50, 1
        %s239 = scalar_lea.sflag [#allocation4], %s238
        %s240 = sand.u32 %s50, 1
        %s241 = smul.addr %s240, 512
        %s242 = scalar_lea.vmem [#allocation3], %s241
        %p243 = pneg %p63
        %p244 = pneg %p60
        %p245 = pneg %p89
        %p246 = pneg %p86
        %p247 = pneg %p115
        %p248 = pneg %p112
        %p249 = pneg %p143
        %p250 = pneg %p140
        %s251 = sand.u32 %s130, 1
        %s252 = scalar_lea.sflag [#allocation5], %s251
        %s253 = sand.u32 %s130, 1
        %s254 = smul.addr %s253, 256
        %s255 = scalar_lea.vmem [#allocation9], %s254
        %s256 = smul.u32 64, %s27
        %s257 = smul.u32 2, %s28
        %s258 = smul.u32 64, %s27
        %p260 = scmp.eq.s32.totalorder %s28, 0
        // Predicated region
        $region45: #{tpu_custom_call.1} parent=31 // pred_check
          %p261 = pneg %p260
        $region46: #{tpu_custom_call.1} parent=31 // pred_check_branch
          %263 = sbr.rel (%p261) target = $region48
        $region47: #{tpu_custom_call.1} parent=31 // pred_region
          %264 = vst [vmem:[#allocation2] sm:$0xff] 0.0
          %265 = vst [vmem:[#allocation2 + $0x8] sm:$0xff] 0.0
          %266 = vst [vmem:[#allocation2 + $0x10] sm:$0xff] 0.0
          %267 = vst [vmem:[#allocation2 + $0x18] sm:$0xff] 0.0
          %268 = vst [vmem:[#allocation2 + $0x20] sm:$0xff] 0.0
          %269 = vst [vmem:[#allocation2 + $0x28] sm:$0xff] 0.0
          %270 = vst [vmem:[#allocation2 + $0x30] sm:$0xff] 0.0
          %271 = vst [vmem:[#allocation2 + $0x38] sm:$0xff] 0.0
          %272 = vst [vmem:[#allocation2 + $0x40] sm:$0xff] 0.0
          %273 = vst [vmem:[#allocation2 + $0x48] sm:$0xff] 0.0
          %274 = vst [vmem:[#allocation2 + $0x50] sm:$0xff] 0.0
          %275 = vst [vmem:[#allocation2 + $0x58] sm:$0xff] 0.0
          %276 = vst [vmem:[#allocation2 + $0x60] sm:$0xff] 0.0
          %277 = vst [vmem:[#allocation2 + $0x68] sm:$0xff] 0.0
          %278 = vst [vmem:[#allocation2 + $0x70] sm:$0xff] 0.0
          %279 = vst [vmem:[#allocation2 + $0x78] sm:$0xff] 0.0
          %280 = vst [vmem:[#allocation2 + $0x80] sm:$0xff] 0.0
          %281 = vst [vmem:[#allocation2 + $0x88] sm:$0xff] 0.0
          %282 = vst [vmem:[#allocation2 + $0x90] sm:$0xff] 0.0
          %283 = vst [vmem:[#allocation2 + $0x98] sm:$0xff] 0.0
          %284 = vst [vmem:[#allocation2 + $0xa0] sm:$0xff] 0.0
          %285 = vst [vmem:[#allocation2 + $0xa8] sm:$0xff] 0.0
          %286 = vst [vmem:[#allocation2 + $0xb0] sm:$0xff] 0.0
          %287 = vst [vmem:[#allocation2 + $0xb8] sm:$0xff] 0.0
          %288 = vst [vmem:[#allocation2 + $0xc0] sm:$0xff] 0.0
          %289 = vst [vmem:[#allocation2 + $0xc8] sm:$0xff] 0.0
          %290 = vst [vmem:[#allocation2 + $0xd0] sm:$0xff] 0.0
          %291 = vst [vmem:[#allocation2 + $0xd8] sm:$0xff] 0.0
          %292 = vst [vmem:[#allocation2 + $0xe0] sm:$0xff] 0.0
          %293 = vst [vmem:[#allocation2 + $0xe8] sm:$0xff] 0.0
          %294 = vst [vmem:[#allocation2 + $0xf0] sm:$0xff] 0.0
          %295 = vst [vmem:[#allocation2 + $0xf8] sm:$0xff] 0.0
          %296 = vst [vmem:[#allocation2 + $0x100] sm:$0xff] 0.0
          %297 = vst [vmem:[#allocation2 + $0x108] sm:$0xff] 0.0
          %298 = vst [vmem:[#allocation2 + $0x110] sm:$0xff] 0.0
          %299 = vst [vmem:[#allocation2 + $0x118] sm:$0xff] 0.0
          %300 = vst [vmem:[#allocation2 + $0x120] sm:$0xff] 0.0
          %301 = vst [vmem:[#allocation2 + $0x128] sm:$0xff] 0.0
          %302 = vst [vmem:[#allocation2 + $0x130] sm:$0xff] 0.0
          %303 = vst [vmem:[#allocation2 + $0x138] sm:$0xff] 0.0
          %304 = vst [vmem:[#allocation2 + $0x140] sm:$0xff] 0.0
          %305 = vst [vmem:[#allocation2 + $0x148] sm:$0xff] 0.0
          %306 = vst [vmem:[#allocation2 + $0x150] sm:$0xff] 0.0
          %307 = vst [vmem:[#allocation2 + $0x158] sm:$0xff] 0.0
          %308 = vst [vmem:[#allocation2 + $0x160] sm:$0xff] 0.0
          %309 = vst [vmem:[#allocation2 + $0x168] sm:$0xff] 0.0
          %310 = vst [vmem:[#allocation2 + $0x170] sm:$0xff] 0.0
          %311 = vst [vmem:[#allocation2 + $0x178] sm:$0xff] 0.0
          %312 = vst [vmem:[#allocation2 + $0x180] sm:$0xff] 0.0
          %313 = vst [vmem:[#allocation2 + $0x188] sm:$0xff] 0.0
          %314 = vst [vmem:[#allocation2 + $0x190] sm:$0xff] 0.0
          %315 = vst [vmem:[#allocation2 + $0x198] sm:$0xff] 0.0
          %316 = vst [vmem:[#allocation2 + $0x1a0] sm:$0xff] 0.0
          %317 = vst [vmem:[#allocation2 + $0x1a8] sm:$0xff] 0.0
          %318 = vst [vmem:[#allocation2 + $0x1b0] sm:$0xff] 0.0
          %319 = vst [vmem:[#allocation2 + $0x1b8] sm:$0xff] 0.0
          %320 = vst [vmem:[#allocation2 + $0x1c0] sm:$0xff] 0.0
          %321 = vst [vmem:[#allocation2 + $0x1c8] sm:$0xff] 0.0
          %322 = vst [vmem:[#allocation2 + $0x1d0] sm:$0xff] 0.0
          %323 = vst [vmem:[#allocation2 + $0x1d8] sm:$0xff] 0.0
          %324 = vst [vmem:[#allocation2 + $0x1e0] sm:$0xff] 0.0
          %325 = vst [vmem:[#allocation2 + $0x1e8] sm:$0xff] 0.0
          %326 = vst [vmem:[#allocation2 + $0x1f0] sm:$0xff] 0.0
          %327 = vst [vmem:[#allocation2 + $0x1f8] sm:$0xff] 0.0
        $region48: #{tpu_custom_call.1} parent=31 // pred_fallthru
          _
        %v328 = vld [vmem:[#allocation6] sm:$0xf]
        %v329 = vld [vmem:[#allocation6 + $0x4] sm:$0xf]
        %v330 = vld [vmem:[#allocation6 + $0x8] sm:$0xf]
        %v331 = vld [vmem:[#allocation6 + $0xc] sm:$0xf]
        %v332 = vld [vmem:[#allocation6 + $0x10] sm:$0xf]
        %v333 = vld [vmem:[#allocation6 + $0x14] sm:$0xf]
        %v334 = vld [vmem:[#allocation6 + $0x18] sm:$0xf]
        %v335 = vld [vmem:[#allocation6 + $0x1c] sm:$0xf]
        %v336 = vld [vmem:[#allocation6 + $0x20] sm:$0xf]
        %v337 = vld [vmem:[#allocation6 + $0x24] sm:$0xf]
        %v338 = vld [vmem:[#allocation6 + $0x28] sm:$0xf]
        %v339 = vld [vmem:[#allocation6 + $0x2c] sm:$0xf]
        %v340 = vld [vmem:[#allocation6 + $0x30] sm:$0xf]
        %v341 = vld [vmem:[#allocation6 + $0x34] sm:$0xf]
        %v342 = vld [vmem:[#allocation6 + $0x38] sm:$0xf]
        %v343 = vld [vmem:[#allocation6 + $0x3c] sm:$0xf]
        %v344 = vld [vmem:[#allocation6 + $0x40] sm:$0xf]
        %v345 = vld [vmem:[#allocation6 + $0x44] sm:$0xf]
        %v346 = vld [vmem:[#allocation6 + $0x48] sm:$0xf]
        %v347 = vld [vmem:[#allocation6 + $0x4c] sm:$0xf]
        %v348 = vld [vmem:[#allocation6 + $0x50] sm:$0xf]
        %v349 = vld [vmem:[#allocation6 + $0x54] sm:$0xf]
        %v350 = vld [vmem:[#allocation6 + $0x58] sm:$0xf]
        %v351 = vld [vmem:[#allocation6 + $0x5c] sm:$0xf]
        %v352 = vld [vmem:[#allocation6 + $0x60] sm:$0xf]
        %v353 = vld [vmem:[#allocation6 + $0x64] sm:$0xf]
        %v354 = vld [vmem:[#allocation6 + $0x68] sm:$0xf]
        %v355 = vld [vmem:[#allocation6 + $0x6c] sm:$0xf]
        %v356 = vld [vmem:[#allocation6 + $0x70] sm:$0xf]
        %v357 = vld [vmem:[#allocation6 + $0x74] sm:$0xf]
        %v358 = vld [vmem:[#allocation6 + $0x78] sm:$0xf]
        %v359 = vld [vmem:[#allocation6 + $0x7c] sm:$0xf]
        %v360 = vld [vmem:[#allocation2] sm:$0xff]
        %v361 = vld [vmem:[#allocation2 + $0x8] sm:$0xff]
        %v362 = vld [vmem:[#allocation2 + $0x10] sm:$0xff]
        %v363 = vld [vmem:[#allocation2 + $0x18] sm:$0xff]
        %v364 = vld [vmem:[#allocation2 + $0x20] sm:$0xff]
        %v365 = vld [vmem:[#allocation2 + $0x28] sm:$0xff]
        %v366 = vld [vmem:[#allocation2 + $0x30] sm:$0xff]
        %v367 = vld [vmem:[#allocation2 + $0x38] sm:$0xff]
        %v368 = vld [vmem:[#allocation2 + $0x40] sm:$0xff]
        %v369 = vld [vmem:[#allocation2 + $0x48] sm:$0xff]
        %v370 = vld [vmem:[#allocation2 + $0x50] sm:$0xff]
        %v371 = vld [vmem:[#allocation2 + $0x58] sm:$0xff]
        %v372 = vld [vmem:[#allocation2 + $0x60] sm:$0xff]
        %v373 = vld [vmem:[#allocation2 + $0x68] sm:$0xff]
        %v374 = vld [vmem:[#allocation2 + $0x70] sm:$0xff]
        %v375 = vld [vmem:[#allocation2 + $0x78] sm:$0xff]
        %v376 = vld [vmem:[#allocation2 + $0x80] sm:$0xff]
        %v377 = vld [vmem:[#allocation2 + $0x88] sm:$0xff]
        %v378 = vld [vmem:[#allocation2 + $0x90] sm:$0xff]
        %v379 = vld [vmem:[#allocation2 + $0x98] sm:$0xff]
        %v380 = vld [vmem:[#allocation2 + $0xa0] sm:$0xff]
        %v381 = vld [vmem:[#allocation2 + $0xa8] sm:$0xff]
        %v382 = vld [vmem:[#allocation2 + $0xb0] sm:$0xff]
        %v383 = vld [vmem:[#allocation2 + $0xb8] sm:$0xff]
        %v384 = vld [vmem:[#allocation2 + $0xc0] sm:$0xff]
        %v385 = vld [vmem:[#allocation2 + $0xc8] sm:$0xff]
        %v386 = vld [vmem:[#allocation2 + $0xd0] sm:$0xff]
        %v387 = vld [vmem:[#allocation2 + $0xd8] sm:$0xff]
        %v388 = vld [vmem:[#allocation2 + $0xe0] sm:$0xff]
        %v389 = vld [vmem:[#allocation2 + $0xe8] sm:$0xff]
        %v390 = vld [vmem:[#allocation2 + $0xf0] sm:$0xff]
        %v391 = vld [vmem:[#allocation2 + $0xf8] sm:$0xff]
        %v392 = vld [vmem:[#allocation2 + $0x100] sm:$0xff]
        %v393 = vld [vmem:[#allocation2 + $0x108] sm:$0xff]
        %v394 = vld [vmem:[#allocation2 + $0x110] sm:$0xff]
        %v395 = vld [vmem:[#allocation2 + $0x118] sm:$0xff]
        %v396 = vld [vmem:[#allocation2 + $0x120] sm:$0xff]
        %v397 = vld [vmem:[#allocation2 + $0x128] sm:$0xff]
        %v398 = vld [vmem:[#allocation2 + $0x130] sm:$0xff]
        %v399 = vld [vmem:[#allocation2 + $0x138] sm:$0xff]
        %v400 = vld [vmem:[#allocation2 + $0x140] sm:$0xff]
        %v401 = vld [vmem:[#allocation2 + $0x148] sm:$0xff]
        %v402 = vld [vmem:[#allocation2 + $0x150] sm:$0xff]
        %v403 = vld [vmem:[#allocation2 + $0x158] sm:$0xff]
        %v404 = vld [vmem:[#allocation2 + $0x160] sm:$0xff]
        %v405 = vld [vmem:[#allocation2 + $0x168] sm:$0xff]
        %v406 = vld [vmem:[#allocation2 + $0x170] sm:$0xff]
        %v407 = vld [vmem:[#allocation2 + $0x178] sm:$0xff]
        %v408 = vld [vmem:[#allocation2 + $0x180] sm:$0xff]
        %v409 = vld [vmem:[#allocation2 + $0x188] sm:$0xff]
        %v410 = vld [vmem:[#allocation2 + $0x190] sm:$0xff]
        %v411 = vld [vmem:[#allocation2 + $0x198] sm:$0xff]
        %v412 = vld [vmem:[#allocation2 + $0x1a0] sm:$0xff]
        %v413 = vld [vmem:[#allocation2 + $0x1a8] sm:$0xff]
        %v414 = vld [vmem:[#allocation2 + $0x1b0] sm:$0xff]
        %v415 = vld [vmem:[#allocation2 + $0x1b8] sm:$0xff]
        %v416 = vld [vmem:[#allocation2 + $0x1c0] sm:$0xff]
        %v417 = vld [vmem:[#allocation2 + $0x1c8] sm:$0xff]
        %v418 = vld [vmem:[#allocation2 + $0x1d0] sm:$0xff]
        %v419 = vld [vmem:[#allocation2 + $0x1d8] sm:$0xff]
        %v420 = vld [vmem:[#allocation2 + $0x1e0] sm:$0xff]
        %v421 = vld [vmem:[#allocation2 + $0x1e8] sm:$0xff]
        %v422 = vld [vmem:[#allocation2 + $0x1f0] sm:$0xff]
        %v423 = vld [vmem:[#allocation2 + $0x1f8] sm:$0xff]
        %v424 = vld [vmem:[%s225] sm:$0xff]
        %v425 = vld [vmem:[%s225 + $0x8] sm:$0xff]
        %v426 = vld [vmem:[%s225 + $0x10] sm:$0xff]
        %v427 = vld [vmem:[%s225 + $0x18] sm:$0xff]
        %v428 = vld [vmem:[%s225 + $0x20] sm:$0xff]
        %v429 = vld [vmem:[%s225 + $0x28] sm:$0xff]
        %v430 = vld [vmem:[%s225 + $0x30] sm:$0xff]
        %v431 = vld [vmem:[%s225 + $0x38] sm:$0xff]
        %v432 = vld [vmem:[%s225 + $0x40] sm:$0xff]
        %v433 = vld [vmem:[%s225 + $0x48] sm:$0xff]
        %v434 = vld [vmem:[%s225 + $0x50] sm:$0xff]
        %v435 = vld [vmem:[%s225 + $0x58] sm:$0xff]
        %v436 = vld [vmem:[%s225 + $0x60] sm:$0xff]
        %v437 = vld [vmem:[%s225 + $0x68] sm:$0xff]
        %v438 = vld [vmem:[%s225 + $0x70] sm:$0xff]
        %v439 = vld [vmem:[%s225 + $0x78] sm:$0xff]
        %v440 = vld [vmem:[%s225 + $0x80] sm:$0xff]
        %v441 = vld [vmem:[%s225 + $0x88] sm:$0xff]
        %v442 = vld [vmem:[%s225 + $0x90] sm:$0xff]
        %v443 = vld [vmem:[%s225 + $0x98] sm:$0xff]
        %v444 = vld [vmem:[%s225 + $0xa0] sm:$0xff]
        %v445 = vld [vmem:[%s225 + $0xa8] sm:$0xff]
        %v446 = vld [vmem:[%s225 + $0xb0] sm:$0xff]
        %v447 = vld [vmem:[%s225 + $0xb8] sm:$0xff]
        %v448 = vld [vmem:[%s225 + $0xc0] sm:$0xff]
        %v449 = vld [vmem:[%s225 + $0xc8] sm:$0xff]
        %v450 = vld [vmem:[%s225 + $0xd0] sm:$0xff]
        %v451 = vld [vmem:[%s225 + $0xd8] sm:$0xff]
        %v452 = vld [vmem:[%s225 + $0xe0] sm:$0xff]
        %v453 = vld [vmem:[%s225 + $0xe8] sm:$0xff]
        %v454 = vld [vmem:[%s225 + $0xf0] sm:$0xff]
        %v455 = vld [vmem:[%s225 + $0xf8] sm:$0xff]
        %v456 = vld [vmem:[%s225 + $0x100] sm:$0xff]
        %v457 = vld [vmem:[%s225 + $0x108] sm:$0xff]
        %v458 = vld [vmem:[%s225 + $0x110] sm:$0xff]
        %v459 = vld [vmem:[%s225 + $0x118] sm:$0xff]
        %v460 = vld [vmem:[%s225 + $0x120] sm:$0xff]
        %v461 = vld [vmem:[%s225 + $0x128] sm:$0xff]
        %v462 = vld [vmem:[%s225 + $0x130] sm:$0xff]
        %v463 = vld [vmem:[%s225 + $0x138] sm:$0xff]
        %v464 = vld [vmem:[%s225 + $0x140] sm:$0xff]
        %v465 = vld [vmem:[%s225 + $0x148] sm:$0xff]
        %v466 = vld [vmem:[%s225 + $0x150] sm:$0xff]
        %v467 = vld [vmem:[%s225 + $0x158] sm:$0xff]
        %v468 = vld [vmem:[%s225 + $0x160] sm:$0xff]
        %v469 = vld [vmem:[%s225 + $0x168] sm:$0xff]
        %v470 = vld [vmem:[%s225 + $0x170] sm:$0xff]
        %v471 = vld [vmem:[%s225 + $0x178] sm:$0xff]
        %v472 = vld [vmem:[%s225 + $0x180] sm:$0xff]
        %v473 = vld [vmem:[%s225 + $0x188] sm:$0xff]
        %v474 = vld [vmem:[%s225 + $0x190] sm:$0xff]
        %v475 = vld [vmem:[%s225 + $0x198] sm:$0xff]
        %v476 = vld [vmem:[%s225 + $0x1a0] sm:$0xff]
        %v477 = vld [vmem:[%s225 + $0x1a8] sm:$0xff]
        %v478 = vld [vmem:[%s225 + $0x1b0] sm:$0xff]
        %v479 = vld [vmem:[%s225 + $0x1b8] sm:$0xff]
        %v480 = vld [vmem:[%s225 + $0x1c0] sm:$0xff]
        %v481 = vld [vmem:[%s225 + $0x1c8] sm:$0xff]
        %v482 = vld [vmem:[%s225 + $0x1d0] sm:$0xff]
        %v483 = vld [vmem:[%s225 + $0x1d8] sm:$0xff]
        %v484 = vld [vmem:[%s225 + $0x1e0] sm:$0xff]
        %v485 = vld [vmem:[%s225 + $0x1e8] sm:$0xff]
        %v486 = vld [vmem:[%s225 + $0x1f0] sm:$0xff]
        %v487 = vld [vmem:[%s225 + $0x1f8] sm:$0xff]
        %v552 = vunpack.c.l.b16 %v424
        %v553 = vunpack.c.h.b16 %v424
        %v554 = vunpack.c.l.b16 %v425
        %v555 = vunpack.c.h.b16 %v425
        %v556 = vunpack.c.l.b16 %v426
        %v557 = vunpack.c.h.b16 %v426
        %v558 = vunpack.c.l.b16 %v427
        %v559 = vunpack.c.h.b16 %v427
        %v560 = vunpack.c.l.b16 %v428
        %v561 = vunpack.c.h.b16 %v428
        %v562 = vunpack.c.l.b16 %v429
        %v563 = vunpack.c.h.b16 %v429
        %v564 = vunpack.c.l.b16 %v430
        %v565 = vunpack.c.h.b16 %v430
        %v566 = vunpack.c.l.b16 %v431
        %v567 = vunpack.c.h.b16 %v431
        %v568 = vunpack.c.l.b16 %v432
        %v569 = vunpack.c.h.b16 %v432
        %v570 = vunpack.c.l.b16 %v433
        %v571 = vunpack.c.h.b16 %v433
        %v572 = vunpack.c.l.b16 %v434
        %v573 = vunpack.c.h.b16 %v434
        %v574 = vunpack.c.l.b16 %v435
        %v575 = vunpack.c.h.b16 %v435
        %v576 = vunpack.c.l.b16 %v436
        %v577 = vunpack.c.h.b16 %v436
        %v578 = vunpack.c.l.b16 %v437
        %v579 = vunpack.c.h.b16 %v437
        %v580 = vunpack.c.l.b16 %v438
        %v581 = vunpack.c.h.b16 %v438
        %v582 = vunpack.c.l.b16 %v439
        %v583 = vunpack.c.h.b16 %v439
        %v584 = vunpack.c.l.b16 %v440
        %v585 = vunpack.c.h.b16 %v440
        %v586 = vunpack.c.l.b16 %v441
        %v587 = vunpack.c.h.b16 %v441
        %v588 = vunpack.c.l.b16 %v442
        %v589 = vunpack.c.h.b16 %v442
        %v590 = vunpack.c.l.b16 %v443
        %v591 = vunpack.c.h.b16 %v443
        %v592 = vunpack.c.l.b16 %v444
        %v593 = vunpack.c.h.b16 %v444
        %v594 = vunpack.c.l.b16 %v445
        %v595 = vunpack.c.h.b16 %v445
        %v596 = vunpack.c.l.b16 %v446
        %v597 = vunpack.c.h.b16 %v446
        %v598 = vunpack.c.l.b16 %v447
        %v599 = vunpack.c.h.b16 %v447
        %v600 = vunpack.c.l.b16 %v448
        %v601 = vunpack.c.h.b16 %v448
        %v602 = vunpack.c.l.b16 %v449
        %v603 = vunpack.c.h.b16 %v449
        %v604 = vunpack.c.l.b16 %v450
        %v605 = vunpack.c.h.b16 %v450
        %v606 = vunpack.c.l.b16 %v451
        %v607 = vunpack.c.h.b16 %v451
        %v608 = vunpack.c.l.b16 %v452
        %v609 = vunpack.c.h.b16 %v452
        %v610 = vunpack.c.l.b16 %v453
        %v611 = vunpack.c.h.b16 %v453
        %v612 = vunpack.c.l.b16 %v454
        %v613 = vunpack.c.h.b16 %v454
        %v614 = vunpack.c.l.b16 %v455
        %v615 = vunpack.c.h.b16 %v455
        %v616 = vunpack.c.l.b16 %v456
        %v617 = vunpack.c.h.b16 %v456
        %v618 = vunpack.c.l.b16 %v457
        %v619 = vunpack.c.h.b16 %v457
        %v620 = vunpack.c.l.b16 %v458
        %v621 = vunpack.c.h.b16 %v458
        %v622 = vunpack.c.l.b16 %v459
        %v623 = vunpack.c.h.b16 %v459
        %v624 = vunpack.c.l.b16 %v460
        %v625 = vunpack.c.h.b16 %v460
        %v626 = vunpack.c.l.b16 %v461
        %v627 = vunpack.c.h.b16 %v461
        %v628 = vunpack.c.l.b16 %v462
        %v629 = vunpack.c.h.b16 %v462
        %v630 = vunpack.c.l.b16 %v463
        %v631 = vunpack.c.h.b16 %v463
        %v632 = vunpack.c.l.b16 %v464
        %v633 = vunpack.c.h.b16 %v464
        %v634 = vunpack.c.l.b16 %v465
        %v635 = vunpack.c.h.b16 %v465
        %v636 = vunpack.c.l.b16 %v466
        %v637 = vunpack.c.h.b16 %v466
        %v638 = vunpack.c.l.b16 %v467
        %v639 = vunpack.c.h.b16 %v467
        %v640 = vunpack.c.l.b16 %v468
        %v641 = vunpack.c.h.b16 %v468
        %v642 = vunpack.c.l.b16 %v469
        %v643 = vunpack.c.h.b16 %v469
        %v644 = vunpack.c.l.b16 %v470
        %v645 = vunpack.c.h.b16 %v470
        %v646 = vunpack.c.l.b16 %v471
        %v647 = vunpack.c.h.b16 %v471
        %v648 = vunpack.c.l.b16 %v472
        %v649 = vunpack.c.h.b16 %v472
        %v650 = vunpack.c.l.b16 %v473
        %v651 = vunpack.c.h.b16 %v473
        %v652 = vunpack.c.l.b16 %v474
        %v653 = vunpack.c.h.b16 %v474
        %v654 = vunpack.c.l.b16 %v475
        %v655 = vunpack.c.h.b16 %v475
        %v656 = vunpack.c.l.b16 %v476
        %v657 = vunpack.c.h.b16 %v476
        %v658 = vunpack.c.l.b16 %v477
        %v659 = vunpack.c.h.b16 %v477
        %v660 = vunpack.c.l.b16 %v478
        %v661 = vunpack.c.h.b16 %v478
        %v662 = vunpack.c.l.b16 %v479
        %v663 = vunpack.c.h.b16 %v479
        %v664 = vunpack.c.l.b16 %v480
        %v665 = vunpack.c.h.b16 %v480
        %v666 = vunpack.c.l.b16 %v481
        %v667 = vunpack.c.h.b16 %v481
        %v668 = vunpack.c.l.b16 %v482
        %v669 = vunpack.c.h.b16 %v482
        %v670 = vunpack.c.l.b16 %v483
        %v671 = vunpack.c.h.b16 %v483
        %v672 = vunpack.c.l.b16 %v484
        %v673 = vunpack.c.h.b16 %v484
        %v674 = vunpack.c.l.b16 %v485
        %v675 = vunpack.c.h.b16 %v485
        %v676 = vunpack.c.l.b16 %v486
        %v677 = vunpack.c.h.b16 %v486
        %v678 = vunpack.c.l.b16 %v487
        %v679 = vunpack.c.h.b16 %v487
        %v680 = vpack.c.b16 %v554, %v552
        %v681 = vpack.c.b16 %v555, %v553
        %v682 = vpack.c.b16 %v558, %v556
        %v683 = vpack.c.b16 %v559, %v557
        %v684 = vpack.c.b16 %v562, %v560
        %v685 = vpack.c.b16 %v563, %v561
        %v686 = vpack.c.b16 %v566, %v564
        %v687 = vpack.c.b16 %v567, %v565
        %v688 = vpack.c.b16 %v570, %v568
        %v689 = vpack.c.b16 %v571, %v569
        %v690 = vpack.c.b16 %v574, %v572
        %v691 = vpack.c.b16 %v575, %v573
        %v692 = vpack.c.b16 %v578, %v576
        %v693 = vpack.c.b16 %v579, %v577
        %v694 = vpack.c.b16 %v582, %v580
        %v695 = vpack.c.b16 %v583, %v581
        %v696 = vpack.c.b16 %v586, %v584
        %v697 = vpack.c.b16 %v587, %v585
        %v698 = vpack.c.b16 %v590, %v588
        %v699 = vpack.c.b16 %v591, %v589
        %v700 = vpack.c.b16 %v594, %v592
        %v701 = vpack.c.b16 %v595, %v593
        %v702 = vpack.c.b16 %v598, %v596
        %v703 = vpack.c.b16 %v599, %v597
        %v704 = vpack.c.b16 %v602, %v600
        %v705 = vpack.c.b16 %v603, %v601
        %v706 = vpack.c.b16 %v606, %v604
        %v707 = vpack.c.b16 %v607, %v605
        %v708 = vpack.c.b16 %v610, %v608
        %v709 = vpack.c.b16 %v611, %v609
        %v710 = vpack.c.b16 %v614, %v612
        %v711 = vpack.c.b16 %v615, %v613
        %v712 = vpack.c.b16 %v618, %v616
        %v713 = vpack.c.b16 %v619, %v617
        %v714 = vpack.c.b16 %v622, %v620
        %v715 = vpack.c.b16 %v623, %v621
        %v716 = vpack.c.b16 %v626, %v624
        %v717 = vpack.c.b16 %v627, %v625
        %v718 = vpack.c.b16 %v630, %v628
        %v719 = vpack.c.b16 %v631, %v629
        %v720 = vpack.c.b16 %v634, %v632
        %v721 = vpack.c.b16 %v635, %v633
        %v722 = vpack.c.b16 %v638, %v636
        %v723 = vpack.c.b16 %v639, %v637
        %v724 = vpack.c.b16 %v642, %v640
        %v725 = vpack.c.b16 %v643, %v641
        %v726 = vpack.c.b16 %v646, %v644
        %v727 = vpack.c.b16 %v647, %v645
        %v728 = vpack.c.b16 %v650, %v648
        %v729 = vpack.c.b16 %v651, %v649
        %v730 = vpack.c.b16 %v654, %v652
        %v731 = vpack.c.b16 %v655, %v653
        %v732 = vpack.c.b16 %v658, %v656
        %v733 = vpack.c.b16 %v659, %v657
        %v734 = vpack.c.b16 %v662, %v660
        %v735 = vpack.c.b16 %v663, %v661
        %v736 = vpack.c.b16 %v666, %v664
        %v737 = vpack.c.b16 %v667, %v665
        %v738 = vpack.c.b16 %v670, %v668
        %v739 = vpack.c.b16 %v671, %v669
        %v740 = vpack.c.b16 %v674, %v672
        %v741 = vpack.c.b16 %v675, %v673
        %v742 = vpack.c.b16 %v678, %v676
        %v743 = vpack.c.b16 %v679, %v677
        %v840 = vunpack.c.l.b16 %v328
        %v841 = vunpack.c.l.b16 %v329
        %v842 = vunpack.c.l.b16 %v330
        %v843 = vunpack.c.l.b16 %v331
        %v844 = vunpack.c.l.b16 %v332
        %v845 = vunpack.c.l.b16 %v333
        %v846 = vunpack.c.l.b16 %v334
        %v847 = vunpack.c.l.b16 %v335
        %v848 = vunpack.c.l.b16 %v336
        %v849 = vunpack.c.l.b16 %v337
        %v850 = vunpack.c.l.b16 %v338
        %v851 = vunpack.c.l.b16 %v339
        %v852 = vunpack.c.l.b16 %v340
        %v853 = vunpack.c.l.b16 %v341
        %v854 = vunpack.c.l.b16 %v342
        %v855 = vunpack.c.l.b16 %v343
        %v856 = vunpack.c.l.b16 %v344
        %v857 = vunpack.c.l.b16 %v345
        %v858 = vunpack.c.l.b16 %v346
        %v859 = vunpack.c.l.b16 %v347
        %v860 = vunpack.c.l.b16 %v348
        %v861 = vunpack.c.l.b16 %v349
        %v862 = vunpack.c.l.b16 %v350
        %v863 = vunpack.c.l.b16 %v351
        %v864 = vunpack.c.l.b16 %v352
        %v865 = vunpack.c.l.b16 %v353
        %v866 = vunpack.c.l.b16 %v354
        %v867 = vunpack.c.l.b16 %v355
        %v868 = vunpack.c.l.b16 %v356
        %v869 = vunpack.c.l.b16 %v357
        %v870 = vunpack.c.l.b16 %v358
        %v871 = vunpack.c.l.b16 %v359
        %v872 = vpack.c.b16 %v841, %v840
        %v873 = vpack.c.b16 %v843, %v842
        %v874 = vpack.c.b16 %v845, %v844
        %v875 = vpack.c.b16 %v847, %v846
        %v876 = vpack.c.b16 %v849, %v848
        %v877 = vpack.c.b16 %v851, %v850
        %v878 = vpack.c.b16 %v853, %v852
        %v879 = vpack.c.b16 %v855, %v854
        %v880 = vpack.c.b16 %v857, %v856
        %v881 = vpack.c.b16 %v859, %v858
        %v882 = vpack.c.b16 %v861, %v860
        %v883 = vpack.c.b16 %v863, %v862
        %v884 = vpack.c.b16 %v865, %v864
        %v885 = vpack.c.b16 %v867, %v866
        %v886 = vpack.c.b16 %v869, %v868
        %v887 = vpack.c.b16 %v871, %v870
        %904 = vmatprep.subr.bf16.mxu0 0
        %905 = vmatpush1.bf16.msra.mxu0 %v872
        %906 = vmatprep.subr.bf16.mxu0 0
        %907 = vmatpush1.bf16.msra.mxu0 %v873
        %908 = vmatprep.subr.bf16.mxu0 0
        %909 = vmatpush1.bf16.msra.mxu0 %v874
        %910 = vmatprep.subr.bf16.mxu0 0
        %911 = vmatpush1.bf16.msra.mxu0 %v875
        %912 = vmatprep.subr.bf16.mxu0 0
        %913 = vmatpush1.bf16.msra.mxu0 %v876
        %914 = vmatprep.subr.bf16.mxu0 0
        %915 = vmatpush1.bf16.msra.mxu0 %v877
        %916 = vmatprep.subr.bf16.mxu0 0
        %917 = vmatpush1.bf16.msra.mxu0 %v878
        %918 = vmatprep.subr.bf16.mxu0 0
        %919 = vmatpush1.bf16.msra.mxu0 %v879
        %920 = vmatprep.subr.bf16.mxu0 0
        %921 = vmatpush1.bf16.msra.mxu0 %v880
        %922 = vmatprep.subr.bf16.mxu0 0
        %923 = vmatpush1.bf16.msra.mxu0 %v881
        %924 = vmatprep.subr.bf16.mxu0 0
        %925 = vmatpush1.bf16.msra.mxu0 %v882
        %926 = vmatprep.subr.bf16.mxu0 0
        %927 = vmatpush1.bf16.msra.mxu0 %v883
        %928 = vmatprep.subr.bf16.mxu0 0
        %929 = vmatpush1.bf16.msra.mxu0 %v884
        %930 = vmatprep.subr.bf16.mxu0 0
        %931 = vmatpush1.bf16.msra.mxu0 %v885
        %932 = vmatprep.subr.bf16.mxu0 0
        %933 = vmatpush1.bf16.msra.mxu0 %v886
        %934 = vmatprep.subr.bf16.mxu0 0
        %935 = vmatpush1.bf16.msra.mxu0 %v887
        %936 = vmatprep.mubr.bf16.mxu0 %v681
        %937 = vmatmul.mubr.bf16.gmra.mrb[0].mxu0 %v680
        %v938 = vpop.f32.mrb[0].mxu0
        %v939 = vadd.f32 0.0, %v938
        %v940 = vpop.f32.mrb[0].mxu0
        %v941 = vpop.f32.mrb[0].mxu0
        %v942 = vadd.f32 0.0, %v941
        %v943 = vpop.f32.mrb[0].mxu0
        %944 = vmatprep.mubr.bf16.mxu0 %v683
        %945 = vmatmul.mubr.bf16.gmra.mrb[0].mxu0 %v682
        %v946 = vpop.f32.mrb[0].mxu0
        %v947 = vadd.f32 0.0, %v946
        %v948 = vpop.f32.mrb[0].mxu0
        %v949 = vpop.f32.mrb[0].mxu0
        %v950 = vadd.f32 0.0, %v949
        %v951 = vpop.f32.mrb[0].mxu0
        %952 = vmatprep.mubr.bf16.mxu0 %v685
        %953 = vmatmul.mubr.bf16.gmra.mrb[0].mxu0 %v684
        %v954 = vpop.f32.mrb[0].mxu0
        %v955 = vadd.f32 0.0, %v954
        %v956 = vpop.f32.mrb[0].mxu0
        %v957 = vpop.f32.mrb[0].mxu0
        %v958 = vadd.f32 0.0, %v957
        %v959 = vpop.f32.mrb[0].mxu0
        %960 = vmatprep.mubr.bf16.mxu0 %v687
        %961 = vmatmul.mubr.bf16.gmra.mrb[0].mxu0 %v686
        %v962 = vpop.f32.mrb[0].mxu0
        %v963 = vadd.f32 0.0, %v962
        %v964 = vpop.f32.mrb[0].mxu0
        %v965 = vpop.f32.mrb[0].mxu0
        %v966 = vadd.f32 0.0, %v965
        %v967 = vpop.f32.mrb[0].mxu0
        %968 = vmatprep.mubr.bf16.mxu0 %v689
        %969 = vmatmul.mubr.bf16.gmra.mrb[0].mxu0 %v688
        %v970 = vpop.f32.mrb[0].mxu0
        %v971 = vadd.f32 0.0, %v970
        %v972 = vpop.f32.mrb[0].mxu0
        %v973 = vpop.f32.mrb[0].mxu0
        %v974 = vadd.f32 0.0, %v973
        %v975 = vpop.f32.mrb[0].mxu0
        %976 = vmatprep.mubr.bf16.mxu0 %v691
        %977 = vmatmul.mubr.bf16.gmra.mrb[0].mxu0 %v690
        %v978 = vpop.f32.mrb[0].mxu0
        %v979 = vadd.f32 0.0, %v978
        %v980 = vpop.f32.mrb[0].mxu0
        %v981 = vpop.f32.mrb[0].mxu0
        %v982 = vadd.f32 0.0, %v981
        %v983 = vpop.f32.mrb[0].mxu0
        %984 = vmatprep.mubr.bf16.mxu0 %v693
        %985 = vmatmul.mubr.bf16.gmra.mrb[0].mxu0 %v692
        %v986 = vpop.f32.mrb[0].mxu0
        %v987 = vadd.f32 0.0, %v986
        %v988 = vpop.f32.mrb[0].mxu0
        %v989 = vpop.f32.mrb[0].mxu0
        %v990 = vadd.f32 0.0, %v989
        %v991 = vpop.f32.mrb[0].mxu0
        %992 = vmatprep.mubr.bf16.mxu0 %v695
        %993 = vmatmul.mubr.bf16.gmra.mrb[0].mxu0 %v694
        %v994 = vpop.f32.mrb[0].mxu0
        %v995 = vadd.f32 0.0, %v994
        %v996 = vpop.f32.mrb[0].mxu0
        %v997 = vpop.f32.mrb[0].mxu0
        %v998 = vadd.f32 0.0, %v997
        %v999 = vpop.f32.mrb[0].mxu0
        %1000 = vmatprep.mubr.bf16.mxu0 %v697
        %1001 = vmatmul.mubr.bf16.gmra.mrb[0].mxu0 %v696
        %v1002 = vpop.f32.mrb[0].mxu0
        %v1003 = vadd.f32 0.0, %v1002
        %v1004 = vpop.f32.mrb[0].mxu0
        %v1005 = vpop.f32.mrb[0].mxu0
        %v1006 = vadd.f32 0.0, %v1005
        %v1007 = vpop.f32.mrb[0].mxu0
        %1008 = vmatprep.mubr.bf16.mxu0 %v699
        %1009 = vmatmul.mubr.bf16.gmra.mrb[0].mxu0 %v698
        %v1010 = vpop.f32.mrb[0].mxu0
        %v1011 = vadd.f32 0.0, %v1010
        %v1012 = vpop.f32.mrb[0].mxu0
        %v1013 = vpop.f32.mrb[0].mxu0
        %v1014 = vadd.f32 0.0, %v1013
        %v1015 = vpop.f32.mrb[0].mxu0
        %1016 = vmatprep.mubr.bf16.mxu0 %v701
        %1017 = vmatmul.mubr.bf16.gmra.mrb[0].mxu0 %v700
        %v1018 = vpop.f32.mrb[0].mxu0
        %v1019 = vadd.f32 0.0, %v1018
        %v1020 = vpop.f32.mrb[0].mxu0
        %v1021 = vpop.f32.mrb[0].mxu0
        %v1022 = vadd.f32 0.0, %v1021
        %v1023 = vpop.f32.mrb[0].mxu0
        %1024 = vmatprep.mubr.bf16.mxu0 %v703
        %1025 = vmatmul.mubr.bf16.gmra.mrb[0].mxu0 %v702
        %v1026 = vpop.f32.mrb[0].mxu0
        %v1027 = vadd.f32 0.0, %v1026
        %v1028 = vpop.f32.mrb[0].mxu0
        %v1029 = vpop.f32.mrb[0].mxu0
        %v1030 = vadd.f32 0.0, %v1029
        %v1031 = vpop.f32.mrb[0].mxu0
        %1032 = vmatprep.mubr.bf16.mxu0 %v705
        %1033 = vmatmul.mubr.bf16.gmra.mrb[0].mxu0 %v704
        %v1034 = vpop.f32.mrb[0].mxu0
        %v1035 = vadd.f32 0.0, %v1034
        %v1036 = vpop.f32.mrb[0].mxu0
        %v1037 = vpop.f32.mrb[0].mxu0
        %v1038 = vadd.f32 0.0, %v1037
        %v1039 = vpop.f32.mrb[0].mxu0
        %1040 = vmatprep.mubr.bf16.mxu0 %v707
        %1041 = vmatmul.mubr.bf16.gmra.mrb[0].mxu0 %v706
        %v1042 = vpop.f32.mrb[0].mxu0
        %v1043 = vadd.f32 0.0, %v1042
        %v1044 = vpop.f32.mrb[0].mxu0
        %v1045 = vpop.f32.mrb[0].mxu0
        %v1046 = vadd.f32 0.0, %v1045
        %v1047 = vpop.f32.mrb[0].mxu0
        %1048 = vmatprep.mubr.bf16.mxu0 %v709
        %1049 = vmatmul.mubr.bf16.gmra.mrb[0].mxu0 %v708
        %v1050 = vpop.f32.mrb[0].mxu0
        %v1051 = vadd.f32 0.0, %v1050
        %v1052 = vpop.f32.mrb[0].mxu0
        %v1053 = vpop.f32.mrb[0].mxu0
        %v1054 = vadd.f32 0.0, %v1053
        %v1055 = vpop.f32.mrb[0].mxu0
        %1056 = vmatprep.mubr.bf16.mxu0 %v711
        %1057 = vmatmul.mubr.bf16.gmra.mrb[0].mxu0 %v710
        %v1058 = vpop.f32.mrb[0].mxu0
        %v1059 = vadd.f32 0.0, %v1058
        %v1060 = vpop.f32.mrb[0].mxu0
        %v1061 = vpop.f32.mrb[0].mxu0
        %v1062 = vadd.f32 0.0, %v1061
        %v1063 = vpop.f32.mrb[0].mxu0
        %1064 = vmatprep.mubr.bf16.mxu0 %v713
        %1065 = vmatmul.mubr.bf16.gmra.mrb[0].mxu0 %v712
        %v1066 = vpop.f32.mrb[0].mxu0
        %v1067 = vadd.f32 0.0, %v1066
        %v1068 = vpop.f32.mrb[0].mxu0
        %v1069 = vpop.f32.mrb[0].mxu0
        %v1070 = vadd.f32 0.0, %v1069
        %v1071 = vpop.f32.mrb[0].mxu0
        %1072 = vmatprep.mubr.bf16.mxu0 %v715
        %1073 = vmatmul.mubr.bf16.gmra.mrb[0].mxu0 %v714
        %v1074 = vpop.f32.mrb[0].mxu0
        %v1075 = vadd.f32 0.0, %v1074
        %v1076 = vpop.f32.mrb[0].mxu0
        %v1077 = vpop.f32.mrb[0].mxu0
        %v1078 = vadd.f32 0.0, %v1077
        %v1079 = vpop.f32.mrb[0].mxu0
        %1080 = vmatprep.mubr.bf16.mxu0 %v717
        %1081 = vmatmul.mubr.bf16.gmra.mrb[0].mxu0 %v716
        %v1082 = vpop.f32.mrb[0].mxu0
        %v1083 = vadd.f32 0.0, %v1082
        %v1084 = vpop.f32.mrb[0].mxu0
        %v1085 = vpop.f32.mrb[0].mxu0
        %v1086 = vadd.f32 0.0, %v1085
        %v1087 = vpop.f32.mrb[0].mxu0
        %1088 = vmatprep.mubr.bf16.mxu0 %v719
        %1089 = vmatmul.mubr.bf16.gmra.mrb[0].mxu0 %v718
        %v1090 = vpop.f32.mrb[0].mxu0
        %v1091 = vadd.f32 0.0, %v1090
        %v1092 = vpop.f32.mrb[0].mxu0
        %v1093 = vpop.f32.mrb[0].mxu0
        %v1094 = vadd.f32 0.0, %v1093
        %v1095 = vpop.f32.mrb[0].mxu0
        %1096 = vmatprep.mubr.bf16.mxu0 %v721
        %1097 = vmatmul.mubr.bf16.gmra.mrb[0].mxu0 %v720
        %v1098 = vpop.f32.mrb[0].mxu0
        %v1099 = vadd.f32 0.0, %v1098
        %v1100 = vpop.f32.mrb[0].mxu0
        %v1101 = vpop.f32.mrb[0].mxu0
        %v1102 = vadd.f32 0.0, %v1101
        %v1103 = vpop.f32.mrb[0].mxu0
        %1104 = vmatprep.mubr.bf16.mxu0 %v723
        %1105 = vmatmul.mubr.bf16.gmra.mrb[0].mxu0 %v722
        %v1106 = vpop.f32.mrb[0].mxu0
        %v1107 = vadd.f32 0.0, %v1106
        %v1108 = vpop.f32.mrb[0].mxu0
        %v1109 = vpop.f32.mrb[0].mxu0
        %v1110 = vadd.f32 0.0, %v1109
        %v1111 = vpop.f32.mrb[0].mxu0
        %1112 = vmatprep.mubr.bf16.mxu0 %v725
        %1113 = vmatmul.mubr.bf16.gmra.mrb[0].mxu0 %v724
        %v1114 = vpop.f32.mrb[0].mxu0
        %v1115 = vadd.f32 0.0, %v1114
        %v1116 = vpop.f32.mrb[0].mxu0
        %v1117 = vpop.f32.mrb[0].mxu0
        %v1118 = vadd.f32 0.0, %v1117
        %v1119 = vpop.f32.mrb[0].mxu0
        %1120 = vmatprep.mubr.bf16.mxu0 %v727
        %1121 = vmatmul.mubr.bf16.gmra.mrb[0].mxu0 %v726
        %v1122 = vpop.f32.mrb[0].mxu0
        %v1123 = vadd.f32 0.0, %v1122
        %v1124 = vpop.f32.mrb[0].mxu0
        %v1125 = vpop.f32.mrb[0].mxu0
        %v1126 = vadd.f32 0.0, %v1125
        %v1127 = vpop.f32.mrb[0].mxu0
        %1128 = vmatprep.mubr.bf16.mxu0 %v729
        %1129 = vmatmul.mubr.bf16.gmra.mrb[0].mxu0 %v728
        %v1130 = vpop.f32.mrb[0].mxu0
        %v1131 = vadd.f32 0.0, %v1130
        %v1132 = vpop.f32.mrb[0].mxu0
        %v1133 = vpop.f32.mrb[0].mxu0
        %v1134 = vadd.f32 0.0, %v1133
        %v1135 = vpop.f32.mrb[0].mxu0
        %1136 = vmatprep.mubr.bf16.mxu0 %v731
        %1137 = vmatmul.mubr.bf16.gmra.mrb[0].mxu0 %v730
        %v1138 = vpop.f32.mrb[0].mxu0
        %v1139 = vadd.f32 0.0, %v1138
        %v1140 = vpop.f32.mrb[0].mxu0
        %v1141 = vpop.f32.mrb[0].mxu0
        %v1142 = vadd.f32 0.0, %v1141
        %v1143 = vpop.f32.mrb[0].mxu0
        %1144 = vmatprep.mubr.bf16.mxu0 %v733
        %1145 = vmatmul.mubr.bf16.gmra.mrb[0].mxu0 %v732
        %v1146 = vpop.f32.mrb[0].mxu0
        %v1147 = vadd.f32 0.0, %v1146
        %v1148 = vpop.f32.mrb[0].mxu0
        %v1149 = vpop.f32.mrb[0].mxu0
        %v1150 = vadd.f32 0.0, %v1149
        %v1151 = vpop.f32.mrb[0].mxu0
        %1152 = vmatprep.mubr.bf16.mxu0 %v735
        %1153 = vmatmul.mubr.bf16.gmra.mrb[0].mxu0 %v734
        %v1154 = vpop.f32.mrb[0].mxu0
        %v1155 = vadd.f32 0.0, %v1154
        %v1156 = vpop.f32.mrb[0].mxu0
        %v1157 = vpop.f32.mrb[0].mxu0
        %v1158 = vadd.f32 0.0, %v1157
        %v1159 = vpop.f32.mrb[0].mxu0
        %1160 = vmatprep.mubr.bf16.mxu0 %v737
        %1161 = vmatmul.mubr.bf16.gmra.mrb[0].mxu0 %v736
        %v1162 = vpop.f32.mrb[0].mxu0
        %v1163 = vadd.f32 0.0, %v1162
        %v1164 = vpop.f32.mrb[0].mxu0
        %v1165 = vpop.f32.mrb[0].mxu0
        %v1166 = vadd.f32 0.0, %v1165
        %v1167 = vpop.f32.mrb[0].mxu0
        %1168 = vmatprep.mubr.bf16.mxu0 %v739
        %1169 = vmatmul.mubr.bf16.gmra.mrb[0].mxu0 %v738
        %v1170 = vpop.f32.mrb[0].mxu0
        %v1171 = vadd.f32 0.0, %v1170
        %v1172 = vpop.f32.mrb[0].mxu0
        %v1173 = vpop.f32.mrb[0].mxu0
        %v1174 = vadd.f32 0.0, %v1173
        %v1175 = vpop.f32.mrb[0].mxu0
        %1176 = vmatprep.mubr.bf16.mxu0 %v741
        %1177 = vmatmul.mubr.bf16.gmra.mrb[0].mxu0 %v740
        %v1178 = vpop.f32.mrb[0].mxu0
        %v1179 = vadd.f32 0.0, %v1178
        %v1180 = vpop.f32.mrb[0].mxu0
        %v1181 = vpop.f32.mrb[0].mxu0
        %v1182 = vadd.f32 0.0, %v1181
        %v1183 = vpop.f32.mrb[0].mxu0
        %1184 = vmatprep.mubr.bf16.mxu0 %v743
        %1185 = vmatmul.mubr.bf16.gmra.mrb[0].mxu0 %v742
        %v1186 = vpop.f32.mrb[0].mxu0
        %v1187 = vadd.f32 0.0, %v1186
        %v1188 = vpop.f32.mrb[0].mxu0
        %v1189 = vpop.f32.mrb[0].mxu0
        %v1190 = vadd.f32 0.0, %v1189
        %v1191 = vpop.f32.mrb[0].mxu0
        %1192 = vdwg.mxu0
        %v1193 = vadd.f32 %v360, %v939
        %v1194 = vadd.f32 %v361, %v942
        %v1195 = vadd.f32 %v362, %v947
        %v1196 = vadd.f32 %v363, %v950
        %v1197 = vadd.f32 %v364, %v955
        %v1198 = vadd.f32 %v365, %v958
        %v1199 = vadd.f32 %v366, %v963
        %v1200 = vadd.f32 %v367, %v966
        %v1201 = vadd.f32 %v368, %v971
        %v1202 = vadd.f32 %v369, %v974
        %v1203 = vadd.f32 %v370, %v979
        %v1204 = vadd.f32 %v371, %v982
        %v1205 = vadd.f32 %v372, %v987
        %v1206 = vadd.f32 %v373, %v990
        %v1207 = vadd.f32 %v374, %v995
        %v1208 = vadd.f32 %v375, %v998
        %v1209 = vadd.f32 %v376, %v1003
        %v1210 = vadd.f32 %v377, %v1006
        %v1211 = vadd.f32 %v378, %v1011
        %v1212 = vadd.f32 %v379, %v1014
        %v1213 = vadd.f32 %v380, %v1019
        %v1214 = vadd.f32 %v381, %v1022
        %v1215 = vadd.f32 %v382, %v1027
        %v1216 = vadd.f32 %v383, %v1030
        %v1217 = vadd.f32 %v384, %v1035
        %v1218 = vadd.f32 %v385, %v1038
        %v1219 = vadd.f32 %v386, %v1043
        %v1220 = vadd.f32 %v387, %v1046
        %v1221 = vadd.f32 %v388, %v1051
        %v1222 = vadd.f32 %v389, %v1054
        %v1223 = vadd.f32 %v390, %v1059
        %v1224 = vadd.f32 %v391, %v1062
        %v1225 = vadd.f32 %v392, %v1067
        %v1226 = vadd.f32 %v393, %v1070
        %v1227 = vadd.f32 %v394, %v1075
        %v1228 = vadd.f32 %v395, %v1078
        %v1229 = vadd.f32 %v396, %v1083
        %v1230 = vadd.f32 %v397, %v1086
        %v1231 = vadd.f32 %v398, %v1091
        %v1232 = vadd.f32 %v399, %v1094
        %v1233 = vadd.f32 %v400, %v1099
        %v1234 = vadd.f32 %v401, %v1102
        %v1235 = vadd.f32 %v402, %v1107
        %v1236 = vadd.f32 %v403, %v1110
        %v1237 = vadd.f32 %v404, %v1115
        %v1238 = vadd.f32 %v405, %v1118
        %v1239 = vadd.f32 %v406, %v1123
        %v1240 = vadd.f32 %v407, %v1126
        %v1241 = vadd.f32 %v408, %v1131
        %v1242 = vadd.f32 %v409, %v1134
        %v1243 = vadd.f32 %v410, %v1139
        %v1244 = vadd.f32 %v411, %v1142
        %v1245 = vadd.f32 %v412, %v1147
        %v1246 = vadd.f32 %v413, %v1150
        %v1247 = vadd.f32 %v414, %v1155
        %v1248 = vadd.f32 %v415, %v1158
        %v1249 = vadd.f32 %v416, %v1163
        %v1250 = vadd.f32 %v417, %v1166
        %v1251 = vadd.f32 %v418, %v1171
        %v1252 = vadd.f32 %v419, %v1174
        %v1253 = vadd.f32 %v420, %v1179
        %v1254 = vadd.f32 %v421, %v1182
        %v1255 = vadd.f32 %v422, %v1187
        %v1256 = vadd.f32 %v423, %v1190
        %1257 = vst [vmem:[#allocation2] sm:$0xff] %v1193
        %1258 = vst [vmem:[#allocation2 + $0x8] sm:$0xff] %v1194
        %1259 = vst [vmem:[#allocation2 + $0x10] sm:$0xff] %v1195
        %1260 = vst [vmem:[#allocation2 + $0x18] sm:$0xff] %v1196
        %1261 = vst [vmem:[#allocation2 + $0x20] sm:$0xff] %v1197
        %1262 = vst [vmem:[#allocation2 + $0x28] sm:$0xff] %v1198
        %1263 = vst [vmem:[#allocation2 + $0x30] sm:$0xff] %v1199
        %1264 = vst [vmem:[#allocation2 + $0x38] sm:$0xff] %v1200
        %1265 = vst [vmem:[#allocation2 + $0x40] sm:$0xff] %v1201
        %1266 = vst [vmem:[#allocation2 + $0x48] sm:$0xff] %v1202
        %1267 = vst [vmem:[#allocation2 + $0x50] sm:$0xff] %v1203
        %1268 = vst [vmem:[#allocation2 + $0x58] sm:$0xff] %v1204
        %1269 = vst [vmem:[#allocation2 + $0x60] sm:$0xff] %v1205
        %1270 = vst [vmem:[#allocation2 + $0x68] sm:$0xff] %v1206
        %1271 = vst [vmem:[#allocation2 + $0x70] sm:$0xff] %v1207
        %1272 = vst [vmem:[#allocation2 + $0x78] sm:$0xff] %v1208
        %1273 = vst [vmem:[#allocation2 + $0x80] sm:$0xff] %v1209
        %1274 = vst [vmem:[#allocation2 + $0x88] sm:$0xff] %v1210
        %1275 = vst [vmem:[#allocation2 + $0x90] sm:$0xff] %v1211
        %1276 = vst [vmem:[#allocation2 + $0x98] sm:$0xff] %v1212
        %1277 = vst [vmem:[#allocation2 + $0xa0] sm:$0xff] %v1213
        %1278 = vst [vmem:[#allocation2 + $0xa8] sm:$0xff] %v1214
        %1279 = vst [vmem:[#allocation2 + $0xb0] sm:$0xff] %v1215
        %1280 = vst [vmem:[#allocation2 + $0xb8] sm:$0xff] %v1216
        %1281 = vst [vmem:[#allocation2 + $0xc0] sm:$0xff] %v1217
        %1282 = vst [vmem:[#allocation2 + $0xc8] sm:$0xff] %v1218
        %1283 = vst [vmem:[#allocation2 + $0xd0] sm:$0xff] %v1219
        %1284 = vst [vmem:[#allocation2 + $0xd8] sm:$0xff] %v1220
        %1285 = vst [vmem:[#allocation2 + $0xe0] sm:$0xff] %v1221
        %1286 = vst [vmem:[#allocation2 + $0xe8] sm:$0xff] %v1222
        %1287 = vst [vmem:[#allocation2 + $0xf0] sm:$0xff] %v1223
        %1288 = vst [vmem:[#allocation2 + $0xf8] sm:$0xff] %v1224
        %1289 = vst [vmem:[#allocation2 + $0x100] sm:$0xff] %v1225
        %1290 = vst [vmem:[#allocation2 + $0x108] sm:$0xff] %v1226
        %1291 = vst [vmem:[#allocation2 + $0x110] sm:$0xff] %v1227
        %1292 = vst [vmem:[#allocation2 + $0x118] sm:$0xff] %v1228
        %1293 = vst [vmem:[#allocation2 + $0x120] sm:$0xff] %v1229
        %1294 = vst [vmem:[#allocation2 + $0x128] sm:$0xff] %v1230
        %1295 = vst [vmem:[#allocation2 + $0x130] sm:$0xff] %v1231
        %1296 = vst [vmem:[#allocation2 + $0x138] sm:$0xff] %v1232
        %1297 = vst [vmem:[#allocation2 + $0x140] sm:$0xff] %v1233
        %1298 = vst [vmem:[#allocation2 + $0x148] sm:$0xff] %v1234
        %1299 = vst [vmem:[#allocation2 + $0x150] sm:$0xff] %v1235
        %1300 = vst [vmem:[#allocation2 + $0x158] sm:$0xff] %v1236
        %1301 = vst [vmem:[#allocation2 + $0x160] sm:$0xff] %v1237
        %1302 = vst [vmem:[#allocation2 + $0x168] sm:$0xff] %v1238
        %1303 = vst [vmem:[#allocation2 + $0x170] sm:$0xff] %v1239
        %1304 = vst [vmem:[#allocation2 + $0x178] sm:$0xff] %v1240
        %1305 = vst [vmem:[#allocation2 + $0x180] sm:$0xff] %v1241
        %1306 = vst [vmem:[#allocation2 + $0x188] sm:$0xff] %v1242
        %1307 = vst [vmem:[#allocation2 + $0x190] sm:$0xff] %v1243
        %1308 = vst [vmem:[#allocation2 + $0x198] sm:$0xff] %v1244
        %1309 = vst [vmem:[#allocation2 + $0x1a0] sm:$0xff] %v1245
        %1310 = vst [vmem:[#allocation2 + $0x1a8] sm:$0xff] %v1246
        %1311 = vst [vmem:[#allocation2 + $0x1b0] sm:$0xff] %v1247
        %1312 = vst [vmem:[#allocation2 + $0x1b8] sm:$0xff] %v1248
        %1313 = vst [vmem:[#allocation2 + $0x1c0] sm:$0xff] %v1249
        %1314 = vst [vmem:[#allocation2 + $0x1c8] sm:$0xff] %v1250
        %1315 = vst [vmem:[#allocation2 + $0x1d0] sm:$0xff] %v1251
        %1316 = vst [vmem:[#allocation2 + $0x1d8] sm:$0xff] %v1252
        %1317 = vst [vmem:[#allocation2 + $0x1e0] sm:$0xff] %v1253
        %1318 = vst [vmem:[#allocation2 + $0x1e8] sm:$0xff] %v1254
        %1319 = vst [vmem:[#allocation2 + $0x1f0] sm:$0xff] %v1255
        %1320 = vst [vmem:[#allocation2 + $0x1f8] sm:$0xff] %v1256
        // Predicated region
        $region49: #{tpu_custom_call.1} parent=31 // pred_check
          %p1321 = pneg %p260
        $region50: #{tpu_custom_call.1} parent=31 // pred_check_branch
          %1323 = sbr.rel (%p1321) target = $region52
        $region51: #{tpu_custom_call.1} parent=31 // pred_region
          %v1324 = vld [vmem:[#allocation2] sm:$0xff]
          %v1325 = vld [vmem:[#allocation2 + $0x8] sm:$0xff]
          %v1326 = vld [vmem:[#allocation2 + $0x10] sm:$0xff]
          %v1327 = vld [vmem:[#allocation2 + $0x18] sm:$0xff]
          %v1328 = vld [vmem:[#allocation2 + $0x20] sm:$0xff]
          %v1329 = vld [vmem:[#allocation2 + $0x28] sm:$0xff]
          %v1330 = vld [vmem:[#allocation2 + $0x30] sm:$0xff]
          %v1331 = vld [vmem:[#allocation2 + $0x38] sm:$0xff]
          %v1332 = vld [vmem:[#allocation2 + $0x40] sm:$0xff]
          %v1333 = vld [vmem:[#allocation2 + $0x48] sm:$0xff]
          %v1334 = vld [vmem:[#allocation2 + $0x50] sm:$0xff]
          %v1335 = vld [vmem:[#allocation2 + $0x58] sm:$0xff]
          %v1336 = vld [vmem:[#allocation2 + $0x60] sm:$0xff]
          %v1337 = vld [vmem:[#allocation2 + $0x68] sm:$0xff]
          %v1338 = vld [vmem:[#allocation2 + $0x70] sm:$0xff]
          %v1339 = vld [vmem:[#allocation2 + $0x78] sm:$0xff]
          %v1340 = vld [vmem:[#allocation2 + $0x80] sm:$0xff]
          %v1341 = vld [vmem:[#allocation2 + $0x88] sm:$0xff]
          %v1342 = vld [vmem:[#allocation2 + $0x90] sm:$0xff]
          %v1343 = vld [vmem:[#allocation2 + $0x98] sm:$0xff]
          %v1344 = vld [vmem:[#allocation2 + $0xa0] sm:$0xff]
          %v1345 = vld [vmem:[#allocation2 + $0xa8] sm:$0xff]
          %v1346 = vld [vmem:[#allocation2 + $0xb0] sm:$0xff]
          %v1347 = vld [vmem:[#allocation2 + $0xb8] sm:$0xff]
          %v1348 = vld [vmem:[#allocation2 + $0xc0] sm:$0xff]
          %v1349 = vld [vmem:[#allocation2 + $0xc8] sm:$0xff]
          %v1350 = vld [vmem:[#allocation2 + $0xd0] sm:$0xff]
          %v1351 = vld [vmem:[#allocation2 + $0xd8] sm:$0xff]
          %v1352 = vld [vmem:[#allocation2 + $0xe0] sm:$0xff]
          %v1353 = vld [vmem:[#allocation2 + $0xe8] sm:$0xff]
          %v1354 = vld [vmem:[#allocation2 + $0xf0] sm:$0xff]
          %v1355 = vld [vmem:[#allocation2 + $0xf8] sm:$0xff]
          %v1356 = vld [vmem:[#allocation2 + $0x100] sm:$0xff]
          %v1357 = vld [vmem:[#allocation2 + $0x108] sm:$0xff]
          %v1358 = vld [vmem:[#allocation2 + $0x110] sm:$0xff]
          %v1359 = vld [vmem:[#allocation2 + $0x118] sm:$0xff]
          %v1360 = vld [vmem:[#allocation2 + $0x120] sm:$0xff]
          %v1361 = vld [vmem:[#allocation2 + $0x128] sm:$0xff]
          %v1362 = vld [vmem:[#allocation2 + $0x130] sm:$0xff]
          %v1363 = vld [vmem:[#allocation2 + $0x138] sm:$0xff]
          %v1364 = vld [vmem:[#allocation2 + $0x140] sm:$0xff]
          %v1365 = vld [vmem:[#allocation2 + $0x148] sm:$0xff]
          %v1366 = vld [vmem:[#allocation2 + $0x150] sm:$0xff]
          %v1367 = vld [vmem:[#allocation2 + $0x158] sm:$0xff]
          %v1368 = vld [vmem:[#allocation2 + $0x160] sm:$0xff]
          %v1369 = vld [vmem:[#allocation2 + $0x168] sm:$0xff]
          %v1370 = vld [vmem:[#allocation2 + $0x170] sm:$0xff]
          %v1371 = vld [vmem:[#allocation2 + $0x178] sm:$0xff]
          %v1372 = vld [vmem:[#allocation2 + $0x180] sm:$0xff]
          %v1373 = vld [vmem:[#allocation2 + $0x188] sm:$0xff]
          %v1374 = vld [vmem:[#allocation2 + $0x190] sm:$0xff]
          %v1375 = vld [vmem:[#allocation2 + $0x198] sm:$0xff]
          %v1376 = vld [vmem:[#allocation2 + $0x1a0] sm:$0xff]
          %v1377 = vld [vmem:[#allocation2 + $0x1a8] sm:$0xff]
          %v1378 = vld [vmem:[#allocation2 + $0x1b0] sm:$0xff]
          %v1379 = vld [vmem:[#allocation2 + $0x1b8] sm:$0xff]
          %v1380 = vld [vmem:[#allocation2 + $0x1c0] sm:$0xff]
          %v1381 = vld [vmem:[#allocation2 + $0x1c8] sm:$0xff]
          %v1382 = vld [vmem:[#allocation2 + $0x1d0] sm:$0xff]
          %v1383 = vld [vmem:[#allocation2 + $0x1d8] sm:$0xff]
          %v1384 = vld [vmem:[#allocation2 + $0x1e0] sm:$0xff]
          %v1385 = vld [vmem:[#allocation2 + $0x1e8] sm:$0xff]
          %v1386 = vld [vmem:[#allocation2 + $0x1f0] sm:$0xff]
          %v1387 = vld [vmem:[#allocation2 + $0x1f8] sm:$0xff]
          %v1388 = vld [vmem:[#allocation8] sm:$0x1]
          %v1390 = vlaneseq
          %v1391 = vshrl.u32 %v1390, 7
          %v1392 = vsub.s32 0, %v1391
          %v1393 = vrot.slane %v1388, %v1392
          %v1395 = vadd.f32 %v1324, %v1393
          %v1396 = vadd.f32 %v1325, %v1393
          %v1397 = vadd.f32 %v1326, %v1393
          %v1398 = vadd.f32 %v1327, %v1393
          %v1399 = vadd.f32 %v1328, %v1393
          %v1400 = vadd.f32 %v1329, %v1393
          %v1401 = vadd.f32 %v1330, %v1393
          %v1402 = vadd.f32 %v1331, %v1393
          %v1403 = vadd.f32 %v1332, %v1393
          %v1404 = vadd.f32 %v1333, %v1393
          %v1405 = vadd.f32 %v1334, %v1393
          %v1406 = vadd.f32 %v1335, %v1393
          %v1407 = vadd.f32 %v1336, %v1393
          %v1408 = vadd.f32 %v1337, %v1393
          %v1409 = vadd.f32 %v1338, %v1393
          %v1410 = vadd.f32 %v1339, %v1393
          %v1411 = vadd.f32 %v1340, %v1393
          %v1412 = vadd.f32 %v1341, %v1393
          %v1413 = vadd.f32 %v1342, %v1393
          %v1414 = vadd.f32 %v1343, %v1393
          %v1415 = vadd.f32 %v1344, %v1393
          %v1416 = vadd.f32 %v1345, %v1393
          %v1417 = vadd.f32 %v1346, %v1393
          %v1418 = vadd.f32 %v1347, %v1393
          %v1419 = vadd.f32 %v1348, %v1393
          %v1420 = vadd.f32 %v1349, %v1393
          %v1421 = vadd.f32 %v1350, %v1393
          %v1422 = vadd.f32 %v1351, %v1393
          %v1423 = vadd.f32 %v1352, %v1393
          %v1424 = vadd.f32 %v1353, %v1393
          %v1425 = vadd.f32 %v1354, %v1393
          %v1426 = vadd.f32 %v1355, %v1393
          %v1427 = vadd.f32 %v1356, %v1393
          %v1428 = vadd.f32 %v1357, %v1393
          %v1429 = vadd.f32 %v1358, %v1393
          %v1430 = vadd.f32 %v1359, %v1393
          %v1431 = vadd.f32 %v1360, %v1393
          %v1432 = vadd.f32 %v1361, %v1393
          %v1433 = vadd.f32 %v1362, %v1393
          %v1434 = vadd.f32 %v1363, %v1393
          %v1435 = vadd.f32 %v1364, %v1393
          %v1436 = vadd.f32 %v1365, %v1393
          %v1437 = vadd.f32 %v1366, %v1393
          %v1438 = vadd.f32 %v1367, %v1393
          %v1439 = vadd.f32 %v1368, %v1393
          %v1440 = vadd.f32 %v1369, %v1393
          %v1441 = vadd.f32 %v1370, %v1393
          %v1442 = vadd.f32 %v1371, %v1393
          %v1443 = vadd.f32 %v1372, %v1393
          %v1444 = vadd.f32 %v1373, %v1393
          %v1445 = vadd.f32 %v1374, %v1393
          %v1446 = vadd.f32 %v1375, %v1393
          %v1447 = vadd.f32 %v1376, %v1393
          %v1448 = vadd.f32 %v1377, %v1393
          %v1449 = vadd.f32 %v1378, %v1393
          %v1450 = vadd.f32 %v1379, %v1393
          %v1451 = vadd.f32 %v1380, %v1393
          %v1452 = vadd.f32 %v1381, %v1393
          %v1453 = vadd.f32 %v1382, %v1393
          %v1454 = vadd.f32 %v1383, %v1393
          %v1455 = vadd.f32 %v1384, %v1393
          %v1456 = vadd.f32 %v1385, %v1393
          %v1457 = vadd.f32 %v1386, %v1393
          %v1458 = vadd.f32 %v1387, %v1393
          %vm1459 = vcmp.ge.f32.partialorder %v1395, 0.0
          %vm1460 = vcmp.ge.f32.partialorder %v1396, 0.0
          %vm1461 = vcmp.ge.f32.partialorder %v1397, 0.0
          %vm1462 = vcmp.ge.f32.partialorder %v1398, 0.0
          %vm1463 = vcmp.ge.f32.partialorder %v1399, 0.0
          %vm1464 = vcmp.ge.f32.partialorder %v1400, 0.0
          %vm1465 = vcmp.ge.f32.partialorder %v1401, 0.0
          %vm1466 = vcmp.ge.f32.partialorder %v1402, 0.0
          %vm1467 = vcmp.ge.f32.partialorder %v1403, 0.0
          %vm1468 = vcmp.ge.f32.partialorder %v1404, 0.0
          %vm1469 = vcmp.ge.f32.partialorder %v1405, 0.0
          %vm1470 = vcmp.ge.f32.partialorder %v1406, 0.0
          %vm1471 = vcmp.ge.f32.partialorder %v1407, 0.0
          %vm1472 = vcmp.ge.f32.partialorder %v1408, 0.0
          %vm1473 = vcmp.ge.f32.partialorder %v1409, 0.0
          %vm1474 = vcmp.ge.f32.partialorder %v1410, 0.0
          %vm1475 = vcmp.ge.f32.partialorder %v1411, 0.0
          %vm1476 = vcmp.ge.f32.partialorder %v1412, 0.0
          %vm1477 = vcmp.ge.f32.partialorder %v1413, 0.0
          %vm1478 = vcmp.ge.f32.partialorder %v1414, 0.0
          %vm1479 = vcmp.ge.f32.partialorder %v1415, 0.0
          %vm1480 = vcmp.ge.f32.partialorder %v1416, 0.0
          %vm1481 = vcmp.ge.f32.partialorder %v1417, 0.0
          %vm1482 = vcmp.ge.f32.partialorder %v1418, 0.0
          %vm1483 = vcmp.ge.f32.partialorder %v1419, 0.0
          %vm1484 = vcmp.ge.f32.partialorder %v1420, 0.0
          %vm1485 = vcmp.ge.f32.partialorder %v1421, 0.0
          %vm1486 = vcmp.ge.f32.partialorder %v1422, 0.0
          %vm1487 = vcmp.ge.f32.partialorder %v1423, 0.0
          %vm1488 = vcmp.ge.f32.partialorder %v1424, 0.0
          %vm1489 = vcmp.ge.f32.partialorder %v1425, 0.0
          %vm1490 = vcmp.ge.f32.partialorder %v1426, 0.0
          %vm1491 = vcmp.ge.f32.partialorder %v1427, 0.0
          %vm1492 = vcmp.ge.f32.partialorder %v1428, 0.0
          %vm1493 = vcmp.ge.f32.partialorder %v1429, 0.0
          %vm1494 = vcmp.ge.f32.partialorder %v1430, 0.0
          %vm1495 = vcmp.ge.f32.partialorder %v1431, 0.0
          %vm1496 = vcmp.ge.f32.partialorder %v1432, 0.0
          %vm1497 = vcmp.ge.f32.partialorder %v1433, 0.0
          %vm1498 = vcmp.ge.f32.partialorder %v1434, 0.0
          %vm1499 = vcmp.ge.f32.partialorder %v1435, 0.0
          %vm1500 = vcmp.ge.f32.partialorder %v1436, 0.0
          %vm1501 = vcmp.ge.f32.partialorder %v1437, 0.0
          %vm1502 = vcmp.ge.f32.partialorder %v1438, 0.0
          %vm1503 = vcmp.ge.f32.partialorder %v1439, 0.0
          %vm1504 = vcmp.ge.f32.partialorder %v1440, 0.0
          %vm1505 = vcmp.ge.f32.partialorder %v1441, 0.0
          %vm1506 = vcmp.ge.f32.partialorder %v1442, 0.0
          %vm1507 = vcmp.ge.f32.partialorder %v1443, 0.0
          %vm1508 = vcmp.ge.f32.partialorder %v1444, 0.0
          %vm1509 = vcmp.ge.f32.partialorder %v1445, 0.0
          %vm1510 = vcmp.ge.f32.partialorder %v1446, 0.0
          %vm1511 = vcmp.ge.f32.partialorder %v1447, 0.0
          %vm1512 = vcmp.ge.f32.partialorder %v1448, 0.0
          %vm1513 = vcmp.ge.f32.partialorder %v1449, 0.0
          %vm1514 = vcmp.ge.f32.partialorder %v1450, 0.0
          %vm1515 = vcmp.ge.f32.partialorder %v1451, 0.0
          %vm1516 = vcmp.ge.f32.partialorder %v1452, 0.0
          %vm1517 = vcmp.ge.f32.partialorder %v1453, 0.0
          %vm1518 = vcmp.ge.f32.partialorder %v1454, 0.0
          %vm1519 = vcmp.ge.f32.partialorder %v1455, 0.0
          %vm1520 = vcmp.ge.f32.partialorder %v1456, 0.0
          %vm1521 = vcmp.ge.f32.partialorder %v1457, 0.0
          %vm1522 = vcmp.ge.f32.partialorder %v1458, 0.0
          %v1523 = vmul.f32 %v1395, 0.1
          %v1524 = vmul.f32 %v1396, 0.1
          %v1525 = vmul.f32 %v1397, 0.1
          %v1526 = vmul.f32 %v1398, 0.1
          %v1527 = vmul.f32 %v1399, 0.1
          %v1528 = vmul.f32 %v1400, 0.1
          %v1529 = vmul.f32 %v1401, 0.1
          %v1530 = vmul.f32 %v1402, 0.1
          %v1531 = vmul.f32 %v1403, 0.1
          %v1532 = vmul.f32 %v1404, 0.1
          %v1533 = vmul.f32 %v1405, 0.1
          %v1534 = vmul.f32 %v1406, 0.1
          %v1535 = vmul.f32 %v1407, 0.1
          %v1536 = vmul.f32 %v1408, 0.1
          %v1537 = vmul.f32 %v1409, 0.1
          %v1538 = vmul.f32 %v1410, 0.1
          %v1539 = vmul.f32 %v1411, 0.1
          %v1540 = vmul.f32 %v1412, 0.1
          %v1541 = vmul.f32 %v1413, 0.1
          %v1542 = vmul.f32 %v1414, 0.1
          %v1543 = vmul.f32 %v1415, 0.1
          %v1544 = vmul.f32 %v1416, 0.1
          %v1545 = vmul.f32 %v1417, 0.1
          %v1546 = vmul.f32 %v1418, 0.1
          %v1547 = vmul.f32 %v1419, 0.1
          %v1548 = vmul.f32 %v1420, 0.1
          %v1549 = vmul.f32 %v1421, 0.1
          %v1550 = vmul.f32 %v1422, 0.1
          %v1551 = vmul.f32 %v1423, 0.1
          %v1552 = vmul.f32 %v1424, 0.1
          %v1553 = vmul.f32 %v1425, 0.1
          %v1554 = vmul.f32 %v1426, 0.1
          %v1555 = vmul.f32 %v1427, 0.1
          %v1556 = vmul.f32 %v1428, 0.1
          %v1557 = vmul.f32 %v1429, 0.1
          %v1558 = vmul.f32 %v1430, 0.1
          %v1559 = vmul.f32 %v1431, 0.1
          %v1560 = vmul.f32 %v1432, 0.1
          %v1561 = vmul.f32 %v1433, 0.1
          %v1562 = vmul.f32 %v1434, 0.1
          %v1563 = vmul.f32 %v1435, 0.1
          %v1564 = vmul.f32 %v1436, 0.1
          %v1565 = vmul.f32 %v1437, 0.1
          %v1566 = vmul.f32 %v1438, 0.1
          %v1567 = vmul.f32 %v1439, 0.1
          %v1568 = vmul.f32 %v1440, 0.1
          %v1569 = vmul.f32 %v1441, 0.1
          %v1570 = vmul.f32 %v1442, 0.1
          %v1571 = vmul.f32 %v1443, 0.1
          %v1572 = vmul.f32 %v1444, 0.1
          %v1573 = vmul.f32 %v1445, 0.1
          %v1574 = vmul.f32 %v1446, 0.1
          %v1575 = vmul.f32 %v1447, 0.1
          %v1576 = vmul.f32 %v1448, 0.1
          %v1577 = vmul.f32 %v1449, 0.1
          %v1578 = vmul.f32 %v1450, 0.1
          %v1579 = vmul.f32 %v1451, 0.1
          %v1580 = vmul.f32 %v1452, 0.1
          %v1581 = vmul.f32 %v1453, 0.1
          %v1582 = vmul.f32 %v1454, 0.1
          %v1583 = vmul.f32 %v1455, 0.1
          %v1584 = vmul.f32 %v1456, 0.1
          %v1585 = vmul.f32 %v1457, 0.1
          %v1586 = vmul.f32 %v1458, 0.1
          %v1587 = vsel %vm1459, %v1395, %v1523
          %v1588 = vsel %vm1460, %v1396, %v1524
          %v1589 = vsel %vm1461, %v1397, %v1525
          %v1590 = vsel %vm1462, %v1398, %v1526
          %v1591 = vsel %vm1463, %v1399, %v1527
          %v1592 = vsel %vm1464, %v1400, %v1528
          %v1593 = vsel %vm1465, %v1401, %v1529
          %v1594 = vsel %vm1466, %v1402, %v1530
          %v1595 = vsel %vm1467, %v1403, %v1531
          %v1596 = vsel %vm1468, %v1404, %v1532
          %v1597 = vsel %vm1469, %v1405, %v1533
          %v1598 = vsel %vm1470, %v1406, %v1534
          %v1599 = vsel %vm1471, %v1407, %v1535
          %v1600 = vsel %vm1472, %v1408, %v1536
          %v1601 = vsel %vm1473, %v1409, %v1537
          %v1602 = vsel %vm1474, %v1410, %v1538
          %v1603 = vsel %vm1475, %v1411, %v1539
          %v1604 = vsel %vm1476, %v1412, %v1540
          %v1605 = vsel %vm1477, %v1413, %v1541
          %v1606 = vsel %vm1478, %v1414, %v1542
          %v1607 = vsel %vm1479, %v1415, %v1543
          %v1608 = vsel %vm1480, %v1416, %v1544
          %v1609 = vsel %vm1481, %v1417, %v1545
          %v1610 = vsel %vm1482, %v1418, %v1546
          %v1611 = vsel %vm1483, %v1419, %v1547
          %v1612 = vsel %vm1484, %v1420, %v1548
          %v1613 = vsel %vm1485, %v1421, %v1549
          %v1614 = vsel %vm1486, %v1422, %v1550
          %v1615 = vsel %vm1487, %v1423, %v1551
          %v1616 = vsel %vm1488, %v1424, %v1552
          %v1617 = vsel %vm1489, %v1425, %v1553
          %v1618 = vsel %vm1490, %v1426, %v1554
          %v1619 = vsel %vm1491, %v1427, %v1555
          %v1620 = vsel %vm1492, %v1428, %v1556
          %v1621 = vsel %vm1493, %v1429, %v1557
          %v1622 = vsel %vm1494, %v1430, %v1558
          %v1623 = vsel %vm1495, %v1431, %v1559
          %v1624 = vsel %vm1496, %v1432, %v1560
          %v1625 = vsel %vm1497, %v1433, %v1561
          %v1626 = vsel %vm1498, %v1434, %v1562
          %v1627 = vsel %vm1499, %v1435, %v1563
          %v1628 = vsel %vm1500, %v1436, %v1564
          %v1629 = vsel %vm1501, %v1437, %v1565
          %v1630 = vsel %vm1502, %v1438, %v1566
          %v1631 = vsel %vm1503, %v1439, %v1567
          %v1632 = vsel %vm1504, %v1440, %v1568
          %v1633 = vsel %vm1505, %v1441, %v1569
          %v1634 = vsel %vm1506, %v1442, %v1570
          %v1635 = vsel %vm1507, %v1443, %v1571
          %v1636 = vsel %vm1508, %v1444, %v1572
          %v1637 = vsel %vm1509, %v1445, %v1573
          %v1638 = vsel %vm1510, %v1446, %v1574
          %v1639 = vsel %vm1511, %v1447, %v1575
          %v1640 = vsel %vm1512, %v1448, %v1576
          %v1641 = vsel %vm1513, %v1449, %v1577
          %v1642 = vsel %vm1514, %v1450, %v1578
          %v1643 = vsel %vm1515, %v1451, %v1579
          %v1644 = vsel %vm1516, %v1452, %v1580
          %v1645 = vsel %vm1517, %v1453, %v1581
          %v1646 = vsel %vm1518, %v1454, %v1582
          %v1647 = vsel %vm1519, %v1455, %v1583
          %v1648 = vsel %vm1520, %v1456, %v1584
          %v1649 = vsel %vm1521, %v1457, %v1585
          %v1650 = vsel %vm1522, %v1458, %v1586
          %v1651 = vpack.c.bf16 %v1588, %v1587
          %v1652 = vpack.c.bf16 %v1590, %v1589
          %v1653 = vpack.c.bf16 %v1592, %v1591
          %v1654 = vpack.c.bf16 %v1594, %v1593
          %v1655 = vpack.c.bf16 %v1596, %v1595
          %v1656 = vpack.c.bf16 %v1598, %v1597
          %v1657 = vpack.c.bf16 %v1600, %v1599
          %v1658 = vpack.c.bf16 %v1602, %v1601
          %v1659 = vpack.c.bf16 %v1604, %v1603
          %v1660 = vpack.c.bf16 %v1606, %v1605
          %v1661 = vpack.c.bf16 %v1608, %v1607
          %v1662 = vpack.c.bf16 %v1610, %v1609
          %v1663 = vpack.c.bf16 %v1612, %v1611
          %v1664 = vpack.c.bf16 %v1614, %v1613
          %v1665 = vpack.c.bf16 %v1616, %v1615
          %v1666 = vpack.c.bf16 %v1618, %v1617
          %v1667 = vpack.c.bf16 %v1620, %v1619
          %v1668 = vpack.c.bf16 %v1622, %v1621
          %v1669 = vpack.c.bf16 %v1624, %v1623
          %v1670 = vpack.c.bf16 %v1626, %v1625
          %v1671 = vpack.c.bf16 %v1628, %v1627
          %v1672 = vpack.c.bf16 %v1630, %v1629
          %v1673 = vpack.c.bf16 %v1632, %v1631
          %v1674 = vpack.c.bf16 %v1634, %v1633
          %v1675 = vpack.c.bf16 %v1636, %v1635
          %v1676 = vpack.c.bf16 %v1638, %v1637
          %v1677 = vpack.c.bf16 %v1640, %v1639
          %v1678 = vpack.c.bf16 %v1642, %v1641
          %v1679 = vpack.c.bf16 %v1644, %v1643
          %v1680 = vpack.c.bf16 %v1646, %v1645
          %v1681 = vpack.c.bf16 %v1648, %v1647
          %v1682 = vpack.c.bf16 %v1650, %v1649
          %v1715 = vunpack.c.l.b16 %v1651
          %v1716 = vunpack.c.h.b16 %v1651
          %v1717 = vunpack.c.l.b16 %v1652
          %v1718 = vunpack.c.h.b16 %v1652
          %v1719 = vunpack.c.l.b16 %v1653
          %v1720 = vunpack.c.h.b16 %v1653
          %v1721 = vunpack.c.l.b16 %v1654
          %v1722 = vunpack.c.h.b16 %v1654
          %v1723 = vunpack.c.l.b16 %v1655
          %v1724 = vunpack.c.h.b16 %v1655
          %v1725 = vunpack.c.l.b16 %v1656
          %v1726 = vunpack.c.h.b16 %v1656
          %v1727 = vunpack.c.l.b16 %v1657
          %v1728 = vunpack.c.h.b16 %v1657
          %v1729 = vunpack.c.l.b16 %v1658
          %v1730 = vunpack.c.h.b16 %v1658
          %v1731 = vunpack.c.l.b16 %v1659
          %v1732 = vunpack.c.h.b16 %v1659
          %v1733 = vunpack.c.l.b16 %v1660
          %v1734 = vunpack.c.h.b16 %v1660
          %v1735 = vunpack.c.l.b16 %v1661
          %v1736 = vunpack.c.h.b16 %v1661
          %v1737 = vunpack.c.l.b16 %v1662
          %v1738 = vunpack.c.h.b16 %v1662
          %v1739 = vunpack.c.l.b16 %v1663
          %v1740 = vunpack.c.h.b16 %v1663
          %v1741 = vunpack.c.l.b16 %v1664
          %v1742 = vunpack.c.h.b16 %v1664
          %v1743 = vunpack.c.l.b16 %v1665
          %v1744 = vunpack.c.h.b16 %v1665
          %v1745 = vunpack.c.l.b16 %v1666
          %v1746 = vunpack.c.h.b16 %v1666
          %v1747 = vunpack.c.l.b16 %v1667
          %v1748 = vunpack.c.h.b16 %v1667
          %v1749 = vunpack.c.l.b16 %v1668
          %v1750 = vunpack.c.h.b16 %v1668
          %v1751 = vunpack.c.l.b16 %v1669
          %v1752 = vunpack.c.h.b16 %v1669
          %v1753 = vunpack.c.l.b16 %v1670
          %v1754 = vunpack.c.h.b16 %v1670
          %v1755 = vunpack.c.l.b16 %v1671
          %v1756 = vunpack.c.h.b16 %v1671
          %v1757 = vunpack.c.l.b16 %v1672
          %v1758 = vunpack.c.h.b16 %v1672
          %v1759 = vunpack.c.l.b16 %v1673
          %v1760 = vunpack.c.h.b16 %v1673
          %v1761 = vunpack.c.l.b16 %v1674
          %v1762 = vunpack.c.h.b16 %v1674
          %v1763 = vunpack.c.l.b16 %v1675
          %v1764 = vunpack.c.h.b16 %v1675
          %v1765 = vunpack.c.l.b16 %v1676
          %v1766 = vunpack.c.h.b16 %v1676
          %v1767 = vunpack.c.l.b16 %v1677
          %v1768 = vunpack.c.h.b16 %v1677
          %v1769 = vunpack.c.l.b16 %v1678
          %v1770 = vunpack.c.h.b16 %v1678
          %v1771 = vunpack.c.l.b16 %v1679
          %v1772 = vunpack.c.h.b16 %v1679
          %v1773 = vunpack.c.l.b16 %v1680
          %v1774 = vunpack.c.h.b16 %v1680
          %v1775 = vunpack.c.l.b16 %v1681
          %v1776 = vunpack.c.h.b16 %v1681
          %v1777 = vunpack.c.l.b16 %v1682
          %v1778 = vunpack.c.h.b16 %v1682
          %v1779 = vpack.c.b16 %v1715, %v1715
          %v1780 = vpack.c.b16 %v1716, %v1716
          %v1781 = vpack.c.b16 %v1717, %v1717
          %v1782 = vpack.c.b16 %v1718, %v1718
          %v1783 = vpack.c.b16 %v1719, %v1719
          %v1784 = vpack.c.b16 %v1720, %v1720
          %v1785 = vpack.c.b16 %v1721, %v1721
          %v1786 = vpack.c.b16 %v1722, %v1722
          %v1787 = vpack.c.b16 %v1723, %v1723
          %v1788 = vpack.c.b16 %v1724, %v1724
          %v1789 = vpack.c.b16 %v1725, %v1725
          %v1790 = vpack.c.b16 %v1726, %v1726
          %v1791 = vpack.c.b16 %v1727, %v1727
          %v1792 = vpack.c.b16 %v1728, %v1728
          %v1793 = vpack.c.b16 %v1729, %v1729
          %v1794 = vpack.c.b16 %v1730, %v1730
          %v1795 = vpack.c.b16 %v1731, %v1731
          %v1796 = vpack.c.b16 %v1732, %v1732
          %v1797 = vpack.c.b16 %v1733, %v1733
          %v1798 = vpack.c.b16 %v1734, %v1734
          %v1799 = vpack.c.b16 %v1735, %v1735
          %v1800 = vpack.c.b16 %v1736, %v1736
          %v1801 = vpack.c.b16 %v1737, %v1737
          %v1802 = vpack.c.b16 %v1738, %v1738
          %v1803 = vpack.c.b16 %v1739, %v1739
          %v1804 = vpack.c.b16 %v1740, %v1740
          %v1805 = vpack.c.b16 %v1741, %v1741
          %v1806 = vpack.c.b16 %v1742, %v1742
          %v1807 = vpack.c.b16 %v1743, %v1743
          %v1808 = vpack.c.b16 %v1744, %v1744
          %v1809 = vpack.c.b16 %v1745, %v1745
          %v1810 = vpack.c.b16 %v1746, %v1746
          %v1811 = vpack.c.b16 %v1747, %v1747
          %v1812 = vpack.c.b16 %v1748, %v1748
          %v1813 = vpack.c.b16 %v1749, %v1749
          %v1814 = vpack.c.b16 %v1750, %v1750
          %v1815 = vpack.c.b16 %v1751, %v1751
          %v1816 = vpack.c.b16 %v1752, %v1752
          %v1817 = vpack.c.b16 %v1753, %v1753
          %v1818 = vpack.c.b16 %v1754, %v1754
          %v1819 = vpack.c.b16 %v1755, %v1755
          %v1820 = vpack.c.b16 %v1756, %v1756
          %v1821 = vpack.c.b16 %v1757, %v1757
          %v1822 = vpack.c.b16 %v1758, %v1758
          %v1823 = vpack.c.b16 %v1759, %v1759
          %v1824 = vpack.c.b16 %v1760, %v1760
          %v1825 = vpack.c.b16 %v1761, %v1761
          %v1826 = vpack.c.b16 %v1762, %v1762
          %v1827 = vpack.c.b16 %v1763, %v1763
          %v1828 = vpack.c.b16 %v1764, %v1764
          %v1829 = vpack.c.b16 %v1765, %v1765
          %v1830 = vpack.c.b16 %v1766, %v1766
          %v1831 = vpack.c.b16 %v1767, %v1767
          %v1832 = vpack.c.b16 %v1768, %v1768
          %v1833 = vpack.c.b16 %v1769, %v1769
          %v1834 = vpack.c.b16 %v1770, %v1770
          %v1835 = vpack.c.b16 %v1771, %v1771
          %v1836 = vpack.c.b16 %v1772, %v1772
          %v1837 = vpack.c.b16 %v1773, %v1773
          %v1838 = vpack.c.b16 %v1774, %v1774
          %v1839 = vpack.c.b16 %v1775, %v1775
          %v1840 = vpack.c.b16 %v1776, %v1776
          %v1841 = vpack.c.b16 %v1777, %v1777
          %v1842 = vpack.c.b16 %v1778, %v1778
          %vm1907 = vcmask 519168
          %1908 = vst.msk [vmem:[%s255] sm:$0xf] %vm1907, %v1779
          %1909 = vst.msk [vmem:[%s255 + $0x4] sm:$0xf] %vm1907, %v1780
          %1910 = vst.msk [vmem:[%s255 + $0x8] sm:$0xf] %vm1907, %v1781
          %1911 = vst.msk [vmem:[%s255 + $0xc] sm:$0xf] %vm1907, %v1782
          %1912 = vst.msk [vmem:[%s255 + $0x10] sm:$0xf] %vm1907, %v1783
          %1913 = vst.msk [vmem:[%s255 + $0x14] sm:$0xf] %vm1907, %v1784
          %1914 = vst.msk [vmem:[%s255 + $0x18] sm:$0xf] %vm1907, %v1785
          %1915 = vst.msk [vmem:[%s255 + $0x1c] sm:$0xf] %vm1907, %v1786
          %1916 = vst.msk [vmem:[%s255 + $0x20] sm:$0xf] %vm1907, %v1787
          %1917 = vst.msk [vmem:[%s255 + $0x24] sm:$0xf] %vm1907, %v1788
          %1918 = vst.msk [vmem:[%s255 + $0x28] sm:$0xf] %vm1907, %v1789
          %1919 = vst.msk [vmem:[%s255 + $0x2c] sm:$0xf] %vm1907, %v1790
          %1920 = vst.msk [vmem:[%s255 + $0x30] sm:$0xf] %vm1907, %v1791
          %1921 = vst.msk [vmem:[%s255 + $0x34] sm:$0xf] %vm1907, %v1792
          %1922 = vst.msk [vmem:[%s255 + $0x38] sm:$0xf] %vm1907, %v1793
          %1923 = vst.msk [vmem:[%s255 + $0x3c] sm:$0xf] %vm1907, %v1794
          %1924 = vst.msk [vmem:[%s255 + $0x40] sm:$0xf] %vm1907, %v1795
          %1925 = vst.msk [vmem:[%s255 + $0x44] sm:$0xf] %vm1907, %v1796
          %1926 = vst.msk [vmem:[%s255 + $0x48] sm:$0xf] %vm1907, %v1797
          %1927 = vst.msk [vmem:[%s255 + $0x4c] sm:$0xf] %vm1907, %v1798
          %1928 = vst.msk [vmem:[%s255 + $0x50] sm:$0xf] %vm1907, %v1799
          %1929 = vst.msk [vmem:[%s255 + $0x54] sm:$0xf] %vm1907, %v1800
          %1930 = vst.msk [vmem:[%s255 + $0x58] sm:$0xf] %vm1907, %v1801
          %1931 = vst.msk [vmem:[%s255 + $0x5c] sm:$0xf] %vm1907, %v1802
          %1932 = vst.msk [vmem:[%s255 + $0x60] sm:$0xf] %vm1907, %v1803
          %1933 = vst.msk [vmem:[%s255 + $0x64] sm:$0xf] %vm1907, %v1804
          %1934 = vst.msk [vmem:[%s255 + $0x68] sm:$0xf] %vm1907, %v1805
          %1935 = vst.msk [vmem:[%s255 + $0x6c] sm:$0xf] %vm1907, %v1806
          %1936 = vst.msk [vmem:[%s255 + $0x70] sm:$0xf] %vm1907, %v1807
          %1937 = vst.msk [vmem:[%s255 + $0x74] sm:$0xf] %vm1907, %v1808
          %1938 = vst.msk [vmem:[%s255 + $0x78] sm:$0xf] %vm1907, %v1809
          %1939 = vst.msk [vmem:[%s255 + $0x7c] sm:$0xf] %vm1907, %v1810
          %1940 = vst.msk [vmem:[%s255 + $0x80] sm:$0xf] %vm1907, %v1811
          %1941 = vst.msk [vmem:[%s255 + $0x84] sm:$0xf] %vm1907, %v1812
          %1942 = vst.msk [vmem:[%s255 + $0x88] sm:$0xf] %vm1907, %v1813
          %1943 = vst.msk [vmem:[%s255 + $0x8c] sm:$0xf] %vm1907, %v1814
          %1944 = vst.msk [vmem:[%s255 + $0x90] sm:$0xf] %vm1907, %v1815
          %1945 = vst.msk [vmem:[%s255 + $0x94] sm:$0xf] %vm1907, %v1816
          %1946 = vst.msk [vmem:[%s255 + $0x98] sm:$0xf] %vm1907, %v1817
          %1947 = vst.msk [vmem:[%s255 + $0x9c] sm:$0xf] %vm1907, %v1818
          %1948 = vst.msk [vmem:[%s255 + $0xa0] sm:$0xf] %vm1907, %v1819
          %1949 = vst.msk [vmem:[%s255 + $0xa4] sm:$0xf] %vm1907, %v1820
          %1950 = vst.msk [vmem:[%s255 + $0xa8] sm:$0xf] %vm1907, %v1821
          %1951 = vst.msk [vmem:[%s255 + $0xac] sm:$0xf] %vm1907, %v1822
          %1952 = vst.msk [vmem:[%s255 + $0xb0] sm:$0xf] %vm1907, %v1823
          %1953 = vst.msk [vmem:[%s255 + $0xb4] sm:$0xf] %vm1907, %v1824
          %1954 = vst.msk [vmem:[%s255 + $0xb8] sm:$0xf] %vm1907, %v1825
          %1955 = vst.msk [vmem:[%s255 + $0xbc] sm:$0xf] %vm1907, %v1826
          %1956 = vst.msk [vmem:[%s255 + $0xc0] sm:$0xf] %vm1907, %v1827
          %1957 = vst.msk [vmem:[%s255 + $0xc4] sm:$0xf] %vm1907, %v1828
          %1958 = vst.msk [vmem:[%s255 + $0xc8] sm:$0xf] %vm1907, %v1829
          %1959 = vst.msk [vmem:[%s255 + $0xcc] sm:$0xf] %vm1907, %v1830
          %1960 = vst.msk [vmem:[%s255 + $0xd0] sm:$0xf] %vm1907, %v1831
          %1961 = vst.msk [vmem:[%s255 + $0xd4] sm:$0xf] %vm1907, %v1832
          %1962 = vst.msk [vmem:[%s255 + $0xd8] sm:$0xf] %vm1907, %v1833
          %1963 = vst.msk [vmem:[%s255 + $0xdc] sm:$0xf] %vm1907, %v1834
          %1964 = vst.msk [vmem:[%s255 + $0xe0] sm:$0xf] %vm1907, %v1835
          %1965 = vst.msk [vmem:[%s255 + $0xe4] sm:$0xf] %vm1907, %v1836
          %1966 = vst.msk [vmem:[%s255 + $0xe8] sm:$0xf] %vm1907, %v1837
          %1967 = vst.msk [vmem:[%s255 + $0xec] sm:$0xf] %vm1907, %v1838
          %1968 = vst.msk [vmem:[%s255 + $0xf0] sm:$0xf] %vm1907, %v1839
          %1969 = vst.msk [vmem:[%s255 + $0xf4] sm:$0xf] %vm1907, %v1840
          %1970 = vst.msk [vmem:[%s255 + $0xf8] sm:$0xf] %vm1907, %v1841
          %1971 = vst.msk [vmem:[%s255 + $0xfc] sm:$0xf] %vm1907, %v1842
        $region52: #{tpu_custom_call.1} parent=31 // pred_fallthru
          _
        %s1972 = sand.u32 %s130, 1
        %s1973 = scalar_lea.sflag [#allocation5], %s1972
        %s1974 = sand.u32 %s130, 1
        %s1975 = smul.addr %s1974, 256
        %s1976 = scalar_lea.vmem [#allocation9], %s1975
        // Predicated region
        $region53: #{tpu_custom_call.1} parent=31 // pred_check
          %p1977 = pneg %p140
        $region54: #{tpu_custom_call.1} parent=31 // pred_check_branch
          %1979 = sbr.rel (%p1977) target = $region56
        $region55: #{tpu_custom_call.1} parent=31 // pred_region
          %s1980 = smul.u32 64, %s27
          %s1982 = ssub.s32 4096, 4096
          %1983 = vsyncadd %s1973, %s1982
          %s1984 = sadd.s32 %s26, %s1980
          %s1985 = smul.addr %s1984, 64
          %s1986 = scalar_lea.hbm %s3, %s1985
          %s1987 = sshll.u32 %s1976, 4
          %s1988 = int_to_ptr.vmem [resolvable:$true] %s1987
          %1993 = dma.vmem_to_hbm [thread:$0]  %s1988, 4096, %s1986, %s1973, 64, 64, 4
        $region56: #{tpu_custom_call.1} parent=31 // pred_fallthru
          _
      $region32: #{tpu_custom_call.1} parent=5 // pred_fallthru
        _
      %p1994 = scmp.le.s32.totalorder 2, %s16
      // Predicated region
      $region57: #{tpu_custom_call.1} parent=5 // pred_check
        %p1995 = pneg %p1994
      $region58: #{tpu_custom_call.1} parent=5 // pred_check_branch
        %1997 = sbr.rel (%p1995) target = $region60
      $region59: #{tpu_custom_call.1} parent=5 // pred_region
        %s1998 = ssub.s32 %s16, 2
        // Predicated region
        $region61: #{tpu_custom_call.1} parent=59 // pred_check
          %p1999 = pneg %p146
        $region62: #{tpu_custom_call.1} parent=59 // pred_check_branch
          %2001 = sbr.rel (%p1999) target = $region64
        $region63: #{tpu_custom_call.1} parent=59 // pred_region
          %s2002 = sand.u32 %s131, 1
          %s2003 = scalar_lea.sflag [#allocation5], %s2002
          %s2004 = sand.u32 %s131, 1
          %s2005 = smul.addr %s2004, 256
          %s2006 = scalar_lea.vmem [#allocation9], %s2005
          %2007 = dma.done %s2003, 4096
        $region64: #{tpu_custom_call.1} parent=59 // pred_fallthru
          _
      $region60: #{tpu_custom_call.1} parent=5 // pred_fallthru
        _
    $region6: #{tpu_custom_call.1} parent=1 // loop_footer
      %s20 = sadd.s32 1, %s16
    $region7: #{tpu_custom_call.1} parent=1 // loop_footer_branch
      %15 = sbr.rel target = $region3
    $region8: #{tpu_custom_call.1} parent=1 // loop_exit
      _
    %2008 = vsyncpa [#allocation4], 1
    %s2009 = scalar_lea.sflag [#allocation4], 1
    %2010 = vsyncpa %s2009, 1
    %2011 = vsyncpa [#allocation7], 1
    %2012 = vsyncpa [#allocation5], 1
    %s2013 = scalar_lea.sflag [#allocation5], 1
    %2014 = vsyncpa %s2013, 1

</llo_original>
